<compile_context>
chip_gen: v5e
topology: v5e:2x2
jax: 0.10.0
libtpu: 0.0.40
codegen_flags: <defaults>
</compile_context>

<pallas_src>
import functools

import jax
import jax.numpy as jnp
from jax.experimental import pallas as pl
from jax.experimental.pallas import tpu as pltpu

IN_DIM = 504
EMBED = 100
NUM_CLASSES = 38

EMB_PAD = 128     # 100 -> 128 lanes
CLS_PAD = 128     # 38  -> 128 lanes

BN_EPS = 1e-5
NEG_FILL = -1e30  # padded class logits -> exp() underflows to exactly 0

# h (fc1 output) kept entirely in VMEM when it fits under this budget.
FUSED_H_LIMIT_BYTES = 12 * 1024 * 1024
VMEM_LIMIT_TWO_PASS = 32 * 1024 * 1024
VMEM_LIMIT_FUSED = 48 * 1024 * 1024     # safe on v7x's 64 MiB physical VMEM


def _round_up(x, m):
    return (x + m - 1) // m * m


# --------------------------------------------------------------------------
# Shared head math: BN affine + PReLU + Linear(100->38) + softmax/log_softmax
# --------------------------------------------------------------------------
def _head(h, scale, shift, a, w2, b2):
    hn = h * scale + shift
    z = jnp.where(hn >= 0.0, hn, a * hn)
    logits = jnp.dot(z, w2, preferred_element_type=jnp.float32) + b2
    m = jnp.max(logits, axis=1, keepdims=True)
    shifted = logits - m
    e = jnp.exp(shifted)
    s = jnp.sum(e, axis=1, keepdims=True)
    prob = e * pl.reciprocal(s, approx=False)
    out = shifted - jnp.log(s)
    # Lane-slice to the true output widths; stores become masked vst but the
    # HBM traffic drops ~3.4x for out/prob and the post-kernel slices vanish.
    return out[:, :NUM_CLASSES], z[:, :EMBED], prob[:, :NUM_CLASSES]


# --------------------------------------------------------------------------
# Fused single-call kernel: grid (2, nb); phase 0 = fc1 + stats into VMEM
# scratch, phase 1 = BN/PReLU/fc2/softmax from that scratch.
# --------------------------------------------------------------------------
def _fused_kernel(n_ref, x_ref, w1_ref, b1_ref, gamma_ref, beta_ref, a_ref,
                  w2_ref, b2_ref, out_ref, z_ref, prob_ref,
                  h_scratch, sum_ref, ssq_ref, scale_ref, shift_ref,
                  *, batch_tile, num_blocks):
    p = pl.program_id(0)
    i = pl.program_id(1)

    @pl.when(p == 0)
    def _phase0():
        @pl.when(i == 0)
        def _():
            sum_ref[...] = jnp.zeros_like(sum_ref)
            ssq_ref[...] = jnp.zeros_like(ssq_ref)

        h = jnp.dot(x_ref[...], w1_ref[...],
                    preferred_element_type=jnp.float32) + b1_ref[...]
        row0 = pl.multiple_of(i * batch_tile, 8)
        h_scratch[pl.ds(row0, batch_tile), :] = h

        is_partial = (i + 1) * batch_tile > n_ref[0]

        @pl.when(is_partial)       # mask OOB / padded rows out of the stats
        def _():
            r = jax.lax.broadcasted_iota(jnp.int32, h.shape, 0) + i * batch_tile
            hm = jnp.where(r < n_ref[0], h, 0.0)
            sum_ref[...] += jnp.sum(hm, axis=0, keepdims=True)
            ssq_ref[...] += jnp.sum(hm * hm, axis=0, keepdims=True)

        @pl.when(jnp.logical_not(is_partial))
        def _():
            sum_ref[...] += jnp.sum(h, axis=0, keepdims=True)
            ssq_ref[...] += jnp.sum(h * h, axis=0, keepdims=True)

        @pl.when(i == num_blocks - 1)   # finalize BN scale/shift in-kernel
        def _():
            inv_n = 1.0 / n_ref[0].astype(jnp.float32)
            mean = sum_ref[...] * inv_n
            var = jnp.maximum(ssq_ref[...] * inv_n - mean * mean, 0.0)
            sc = gamma_ref[...] * jax.lax.rsqrt(var + BN_EPS)
            scale_ref[...] = sc
            shift_ref[...] = beta_ref[...] - mean * sc

    @pl.when(p == 1)
    def _phase1():
        row0 = pl.multiple_of(i * batch_tile, 8)
        h = h_scratch[pl.ds(row0, batch_tile), :]
        out, z, prob = _head(h, scale_ref[...], shift_ref[...], a_ref[0, 0],
                             w2_ref[...], b2_ref[...])
        out_ref[...] = out
        z_ref[...] = z
        prob_ref[...] = prob


# --------------------------------------------------------------------------
# Two-pass fallback, pass 1: fc1 + per-block partial sums (parallel-safe).
# --------------------------------------------------------------------------
def _fc1_stats_kernel(n_ref, x_ref, w1_ref, b1_ref,
                      h_ref, psum_ref, pssq_ref, *, batch_tile):
    i = pl.program_id(0)
    h = jnp.dot(x_ref[...], w1_ref[...],
                preferred_element_type=jnp.float32) + b1_ref[...]
    h_ref[...] = h

    is_partial = (i + 1) * batch_tile > n_ref[0]

    @pl.when(is_partial)
    def _():
        r = jax.lax.broadcasted_iota(jnp.int32, h.shape, 0) + i * batch_tile
        hm = jnp.where(r < n_ref[0], h, 0.0)
        psum_ref[0] = jnp.sum(hm, axis=0, keepdims=True)
        pssq_ref[0] = jnp.sum(hm * hm, axis=0, keepdims=True)

    @pl.when(jnp.logical_not(is_partial))
    def _():
        psum_ref[0] = jnp.sum(h, axis=0, keepdims=True)
        pssq_ref[0] = jnp.sum(h * h, axis=0, keepdims=True)


# --------------------------------------------------------------------------
# Two-pass fallback, pass 2: BN affine + PReLU + fc2 + softmax/log_softmax.
# --------------------------------------------------------------------------
def _bn_head_kernel(h_ref, scale_ref, shift_ref, a_ref, w2_ref, b2_ref,
                    out_ref, z_ref, prob_ref):
    out, z, prob = _head(h_ref[...], scale_ref[...], shift_ref[...],
                         a_ref[0, 0], w2_ref[...], b2_ref[...])
    out_ref[...] = out
    z_ref[...] = z
    prob_ref[...] = prob


# --------------------------------------------------------------------------
# Wrapper
# --------------------------------------------------------------------------
def extended_yaleb_net(x, params, *, batch_tile=None, use_fused=None):
    """x: [B, 504] float32. Returns (log_softmax [B,38], z [B,100], prob [B,38])."""
    f32 = jnp.float32
    orig_B = x.shape[0]
    x = x.astype(f32)

    # Tiny-batch corner only: pad batch up to one sublane tile (8 rows).
    if orig_B < 8:
        x = jnp.pad(x, ((0, 8 - orig_B), (0, 0)))
    B = x.shape[0]

    if batch_tile is None:
        batch_tile = 1024
    # Multiple of 8, never larger than the batch (final block may overhang).
    tb = max(8, min(_round_up(batch_tile, 8), (B // 8) * 8))
    nb = (B + tb - 1) // tb

    # ---- pad parameters only (tiny, one-time)
    w1_p = jnp.pad(params["w1"], ((0, 0), (0, EMB_PAD - EMBED)))
    b1_p = jnp.pad(params["b1"], ((0, 0), (0, EMB_PAD - EMBED)))
    gamma_p = jnp.pad(params["gamma"], ((0, 0), (0, EMB_PAD - EMBED)))
    beta_p = jnp.pad(params["beta"], ((0, 0), (0, EMB_PAD - EMBED)))
    w2_p = jnp.pad(params["w2"], ((0, EMB_PAD - EMBED), (0, CLS_PAD - NUM_CLASSES)))
    b2_p = jnp.pad(params["b2"], ((0, 0), (0, CLS_PAD - NUM_CLASSES)),
                   constant_values=NEG_FILL)
    a2 = jnp.asarray(params["prelu_a"], f32).reshape(1, 1)
    n_valid = jnp.array([orig_B], jnp.int32)

    out_shapes = (
        jax.ShapeDtypeStruct((B, NUM_CLASSES), f32),
        jax.ShapeDtypeStruct((B, EMBED), f32),
        jax.ShapeDtypeStruct((B, NUM_CLASSES), f32),
    )

    h_bytes = nb * tb * EMB_PAD * 4
    if use_fused is None:
        use_fused = h_bytes <= FUSED_H_LIMIT_BYTES

    if use_fused:
        # ---- single call: phase 0 (fc1 + stats) then phase 1 (head). h never
        # touches HBM. Both axes must be sequential ("arbitrary").
        out, z, prob = pl.pallas_call(
            functools.partial(_fused_kernel, batch_tile=tb, num_blocks=nb),
            out_shape=out_shapes,
            grid_spec=pltpu.PrefetchScalarGridSpec(
                num_scalar_prefetch=1,
                grid=(2, nb),
                in_specs=[
                    # During phase 1 the x index stays at nb-1 -> no re-fetch.
                    pl.BlockSpec((tb, IN_DIM),
                                 lambda p, i, n: ((1 - p) * i + p * (nb - 1), 0)),
                    pl.BlockSpec((IN_DIM, EMB_PAD), lambda p, i, n: (0, 0)),
                    pl.BlockSpec((1, EMB_PAD), lambda p, i, n: (0, 0)),
                    pl.BlockSpec((1, EMB_PAD), lambda p, i, n: (0, 0)),
                    pl.BlockSpec((1, EMB_PAD), lambda p, i, n: (0, 0)),
                    pl.BlockSpec(memory_space=pltpu.MemorySpace.SMEM),  # prelu_a
                    pl.BlockSpec((EMB_PAD, CLS_PAD), lambda p, i, n: (0, 0)),
                    pl.BlockSpec((1, CLS_PAD), lambda p, i, n: (0, 0)),
                ],
                out_specs=[
                    # Index pinned to 0 during phase 0 -> no garbage writeback.
                    pl.BlockSpec((tb, NUM_CLASSES), lambda p, i, n: (p * i, 0)),
                    pl.BlockSpec((tb, EMBED), lambda p, i, n: (p * i, 0)),
                    pl.BlockSpec((tb, NUM_CLASSES), lambda p, i, n: (p * i, 0)),
                ],
                scratch_shapes=[
                    pltpu.VMEM((nb * tb, EMB_PAD), f32),   # h for the whole batch
                    pltpu.VMEM((1, EMB_PAD), f32),         # sum(h)
                    pltpu.VMEM((1, EMB_PAD), f32),         # sum(h*h)
                    pltpu.VMEM((1, EMB_PAD), f32),         # BN scale
                    pltpu.VMEM((1, EMB_PAD), f32),         # BN shift
                ],
            ),
            compiler_params=pltpu.CompilerParams(
                dimension_semantics=("arbitrary", "arbitrary"),
                vmem_limit_bytes=VMEM_LIMIT_FUSED,
            ),
        )(n_valid, x, w1_p, b1_p, gamma_p, beta_p, a2, w2_p, b2_p)
    else:
        # ---- pass 1: fc1 + per-block partial sums ("parallel" -> megacore)
        h, psum, pssq = pl.pallas_call(
            functools.partial(_fc1_stats_kernel, batch_tile=tb),
            out_shape=(
                jax.ShapeDtypeStruct((B, EMB_PAD), f32),
                jax.ShapeDtypeStruct((nb, 1, EMB_PAD), f32),
                jax.ShapeDtypeStruct((nb, 1, EMB_PAD), f32),
            ),
            grid_spec=pltpu.PrefetchScalarGridSpec(
                num_scalar_prefetch=1,
                grid=(nb,),
                in_specs=[
                    pl.BlockSpec((tb, IN_DIM), lambda i, n: (i, 0)),
                    pl.BlockSpec((IN_DIM, EMB_PAD), lambda i, n: (0, 0)),   # resident
                    pl.BlockSpec((1, EMB_PAD), lambda i, n: (0, 0)),        # resident
                ],
                out_specs=[
                    pl.BlockSpec((tb, EMB_PAD), lambda i, n: (i, 0)),
                    pl.BlockSpec((1, 1, EMB_PAD), lambda i, n: (i, 0, 0)),
                    pl.BlockSpec((1, 1, EMB_PAD), lambda i, n: (i, 0, 0)),
                ],
            ),
            compiler_params=pltpu.CompilerParams(
                dimension_semantics=("parallel",),
                vmem_limit_bytes=VMEM_LIMIT_TWO_PASS,
            ),
        )(n_valid, x, w1_p, b1_p)

        # ---- tiny [1,128] glue: fold mean/var/gamma/beta into scale/shift
        binv = 1.0 / float(orig_B)
        hsum = jnp.sum(psum, axis=0)
        hssq = jnp.sum(pssq, axis=0)
        mean = hsum * binv
        var = jnp.maximum(hssq * binv - mean * mean, 0.0)   # biased (training) var
        scale = gamma_p * jax.lax.rsqrt(var + BN_EPS)
        shift = beta_p - mean * scale

        # ---- pass 2: BN affine + PReLU + fc2 + softmax/log_softmax
        out, z, prob = pl.pallas_call(
            _bn_head_kernel,
            out_shape=out_shapes,
            grid_spec=pltpu.PrefetchScalarGridSpec(
                num_scalar_prefetch=0,
                grid=(nb,),
                in_specs=[
                    pl.BlockSpec((tb, EMB_PAD), lambda i: (i, 0)),
                    pl.BlockSpec((1, EMB_PAD), lambda i: (0, 0)),
                    pl.BlockSpec((1, EMB_PAD), lambda i: (0, 0)),
                    pl.BlockSpec(memory_space=pltpu.MemorySpace.SMEM),  # prelu_a
                    pl.BlockSpec((EMB_PAD, CLS_PAD), lambda i: (0, 0)),  # resident
                    pl.BlockSpec((1, CLS_PAD), lambda i: (0, 0)),        # resident
                ],
                out_specs=[
                    pl.BlockSpec((tb, NUM_CLASSES), lambda i: (i, 0)),
                    pl.BlockSpec((tb, EMBED), lambda i: (i, 0)),
                    pl.BlockSpec((tb, NUM_CLASSES), lambda i: (i, 0)),
                ],
            ),
            compiler_params=pltpu.CompilerParams(
                dimension_semantics=("parallel",),
                vmem_limit_bytes=VMEM_LIMIT_TWO_PASS,
            ),
        )(h, scale, shift, a2, w2_p, b2_p)

    if B != orig_B:   # only the <8-row corner case
        out, z, prob = out[:orig_B], z[:orig_B], prob[:orig_B]
    return out, z, prob


def init_params(key):
    """Deterministic init mimicking torch defaults (uniform +-1/sqrt(fan_in))."""
    k1, k2, k3, k4 = jax.random.split(key, 4)
    bound1 = 1.0 / jnp.sqrt(float(IN_DIM))
    bound2 = 1.0 / jnp.sqrt(float(EMBED))
    return {
        # Stored as [in, out] (transposed vs torch) for row-major matmul.
        "w1": jax.random.uniform(k1, (IN_DIM, EMBED), jnp.float32, -bound1, bound1),
        "b1": jax.random.uniform(k2, (1, EMBED), jnp.float32, -bound1, bound1),
        "gamma": jnp.ones((1, EMBED), jnp.float32),       # BatchNorm1d weight
        "beta": jnp.zeros((1, EMBED), jnp.float32),       # BatchNorm1d bias
        "prelu_a": jnp.full((1, 1), 0.25, jnp.float32),   # PReLU default
        "w2": jax.random.uniform(k3, (EMBED, NUM_CLASSES), jnp.float32, -bound2, bound2),
        "b2": jax.random.uniform(k4, (1, NUM_CLASSES), jnp.float32, -bound2, bound2),
    }


def _reference(x, params):
    """Pure-JAX reference (full-precision matmuls) for a correctness check."""
    hi = jax.lax.Precision.HIGHEST
    h = jnp.dot(x, params["w1"], precision=hi) + params["b1"]
    mean = jnp.mean(h, axis=0, keepdims=True)
    var = jnp.mean((h - mean) ** 2, axis=0, keepdims=True)
    hn = (h - mean) / jnp.sqrt(var + BN_EPS) * params["gamma"] + params["beta"]
    a = params["prelu_a"][0, 0]
    z = jnp.where(hn >= 0, hn, a * hn)
    logits = jnp.dot(z, params["w2"], precision=hi) + params["b2"]
    prob = jax.nn.softmax(logits, axis=1)
    out = jax.nn.log_softmax(logits, axis=1)
    return out, z, prob


if __name__ == "__main__":
    key = jax.random.PRNGKey(0)
    kx, kp = jax.random.split(key)
    B = 20  # not a multiple of 8 -> exercises overhanging blocks + stat masking
    x = jax.random.normal(kx, (B, IN_DIM), jnp.float32)
    params = init_params(kp)

    ref_out, ref_z, ref_prob = _reference(x, params)

    configs = (
        dict(),                                # fused path, default tile
        dict(batch_tile=8),                    # fused path, multi-block + partial tile
        dict(batch_tile=8, use_fused=False),   # two-pass fallback path
    )
    for cfg in configs:
        fwd = jax.jit(functools.partial(extended_yaleb_net, **cfg))
        out, z, prob = fwd(x, params)
        jax.block_until_ready((out, z, prob))

        assert out.shape == (B, NUM_CLASSES)
        assert z.shape == (B, EMBED)
        assert prob.shape == (B, NUM_CLASSES)
        assert jnp.allclose(out, ref_out, atol=1e-4, rtol=1e-4)
        assert jnp.allclose(z, ref_z, atol=1e-4, rtol=1e-4)
        assert jnp.allclose(prob, ref_prob, atol=2e-5, rtol=1e-4)

    print("KERNEL_OK")
</pallas_src>

<mosaic_0001>
module attributes {stable_mosaic.version = 11 : i64} {
  func.func @_fused_kernel(%arg0: i32, %arg1: i32, %arg2: memref<1xi32, #tpu.memory_space<smem>>, %arg3: memref<16x504xf32, #tpu.memory_space<vmem>>, %arg4: memref<504x128xf32, #tpu.memory_space<vmem>>, %arg5: memref<1x128xf32, #tpu.memory_space<vmem>>, %arg6: memref<1x128xf32, #tpu.memory_space<vmem>>, %arg7: memref<1x128xf32, #tpu.memory_space<vmem>>, %arg8: memref<1x1xf32, #tpu.memory_space<smem>>, %arg9: memref<128x128xf32, #tpu.memory_space<vmem>>, %arg10: memref<1x128xf32, #tpu.memory_space<vmem>>, %arg11: memref<16x38xf32, #tpu.memory_space<vmem>>, %arg12: memref<16x100xf32, #tpu.memory_space<vmem>>, %arg13: memref<16x38xf32, #tpu.memory_space<vmem>>, %arg14: memref<32x128xf32, #tpu.memory_space<vmem>>, %arg15: memref<1x128xf32, #tpu.memory_space<vmem>>, %arg16: memref<1x128xf32, #tpu.memory_space<vmem>>, %arg17: memref<1x128xf32, #tpu.memory_space<vmem>>, %arg18: memref<1x128xf32, #tpu.memory_space<vmem>>) attributes {dimension_semantics = [#tpu.dimension_semantics<arbitrary>, #tpu.dimension_semantics<arbitrary>], iteration_bounds = array<i64: 2, 2>, scalar_prefetch = 1 : i64, scratch_operands = 5 : i64, tpu.core_type = #tpu.core_type<tc>, window_params = [{transform_indices = @transform_0, window_bounds = array<i64: 16, 504>}, {pipeline_mode = #tpu.pipeline_mode<synchronous>, transform_indices = @transform_1, window_bounds = array<i64: 504, 128>}, {pipeline_mode = #tpu.pipeline_mode<synchronous>, transform_indices = @transform_2, window_bounds = array<i64: 1, 128>}, {pipeline_mode = #tpu.pipeline_mode<synchronous>, transform_indices = @transform_3, window_bounds = array<i64: 1, 128>}, {pipeline_mode = #tpu.pipeline_mode<synchronous>, transform_indices = @transform_4, window_bounds = array<i64: 1, 128>}, {transform_indices = @transform_5, window_bounds = array<i64: 1, 1>}, {pipeline_mode = #tpu.pipeline_mode<synchronous>, transform_indices = @transform_6, window_bounds = array<i64: 128, 128>}, {pipeline_mode = #tpu.pipeline_mode<synchronous>, transform_indices = @transform_7, window_bounds = array<i64: 1, 128>}, {transform_indices = @transform_8, window_bounds = array<i64: 16, 38>}, {transform_indices = @transform_9, window_bounds = array<i64: 16, 100>}, {transform_indices = @transform_10, window_bounds = array<i64: 16, 38>}]} {
    %c0_i32 = arith.constant 0 : i32
    %0 = arith.cmpi eq, %arg0, %c0_i32 : i32
    %1 = arith.extui %0 : i1 to i32
    %c0_i32_0 = arith.constant 0 : i32
    %2 = arith.cmpi ne, %1, %c0_i32_0 : i32
    scf.if %2 {
      %c0_i32_2 = arith.constant 0 : i32
      %6 = arith.cmpi eq, %arg1, %c0_i32_2 : i32
      %7 = arith.extui %6 : i1 to i32
      %c0_i32_3 = arith.constant 0 : i32
      %8 = arith.cmpi ne, %7, %c0_i32_3 : i32
      scf.if %8 {
        %cst_17 = arith.constant 0.000000e+00 : f32
        %31 = vector.broadcast %cst_17 : f32 to vector<1x128xf32>
        %c0_18 = arith.constant 0 : index
        %c0_19 = arith.constant 0 : index
        %32 = vector.load %arg15[%c0_18, %c0_19] : memref<1x128xf32, #tpu.memory_space<vmem>>, vector<1x128xf32>
        tpu.vector_store %arg15[%c0_18, %c0_19], %31 {strides = array<i32>} : memref<1x128xf32, #tpu.memory_space<vmem>>, vector<1x128xf32>,
        %cst_20 = arith.constant 0.000000e+00 : f32
        %33 = vector.broadcast %cst_20 : f32 to vector<1x128xf32>
        %c0_21 = arith.constant 0 : index
        %c0_22 = arith.constant 0 : index
        %34 = vector.load %arg16[%c0_21, %c0_22] : memref<1x128xf32, #tpu.memory_space<vmem>>, vector<1x128xf32>
        tpu.vector_store %arg16[%c0_21, %c0_22], %33 {strides = array<i32>} : memref<1x128xf32, #tpu.memory_space<vmem>>, vector<1x128xf32>,
      } else {
      }
      %c0 = arith.constant 0 : index
      %c0_4 = arith.constant 0 : index
      %9 = vector.load %arg3[%c0, %c0_4] : memref<16x504xf32, #tpu.memory_space<vmem>>, vector<16x504xf32>
      %c0_5 = arith.constant 0 : index
      %c0_6 = arith.constant 0 : index
      %10 = vector.load %arg4[%c0_5, %c0_6] : memref<504x128xf32, #tpu.memory_space<vmem>>, vector<504x128xf32>
      %cst = arith.constant dense<0.000000e+00> : vector<16x128xf32>
      %11 = tpu.matmul %9, %10, %cst {dimension_numbers = #tpu.dot_dimension_numbers<[1], [0], [0], [1], [0, 0, 1, 1], [], []>} : vector<16x504xf32>, vector<504x128xf32>, vector<16x128xf32> -> vector<16x128xf32>
      %c0_7 = arith.constant 0 : index
      %c0_8 = arith.constant 0 : index
      %12 = vector.load %arg5[%c0_7, %c0_8] : memref<1x128xf32, #tpu.memory_space<vmem>>, vector<1x128xf32>
      %13 = vector.broadcast %12 : vector<1x128xf32> to vector<16x128xf32>
      %14 = arith.addf %11, %13 : vector<16x128xf32>
      %c16_i32 = arith.constant 16 : i32
      %15 = arith.muli %arg1, %c16_i32 : i32
      %16 = tpu.assume_multiple %15, 8 : i32
      %17 = arith.index_cast %16 : i32 to index
      %c0_9 = arith.constant 0 : index
      %18 = vector.load %arg14[%17, %c0_9] : memref<32x128xf32, #tpu.memory_space<vmem>>, vector<16x128xf32>
      tpu.vector_store %arg14[%17, %c0_9], %14 {strides = array<i32>} : memref<32x128xf32, #tpu.memory_space<vmem>>, vector<16x128xf32>,
      %c1_i32_10 = arith.constant 1 : i32
      %19 = arith.addi %arg1, %c1_i32_10 : i32
      %c16_i32_11 = arith.constant 16 : i32
      %20 = arith.muli %19, %c16_i32_11 : i32
      %c0_12 = arith.constant 0 : index
      %21 = memref.load %arg2[%c0_12] : memref<1xi32, #tpu.memory_space<smem>>
      %22 = arith.cmpi sgt, %20, %21 : i32
      %23 = arith.extui %22 : i1 to i32
      %c0_i32_13 = arith.constant 0 : i32
      %24 = arith.cmpi ne, %23, %c0_i32_13 : i32
      scf.if %24 {
        %31 = tpu.iota {dimensions = array<i32: 0>} : vector<16x128xi32>
        %c16_i32_17 = arith.constant 16 : i32
        %32 = arith.muli %arg1, %c16_i32_17 : i32
        %33 = vector.broadcast %32 : i32 to vector<16x128xi32>
        %34 = arith.addi %31, %33 : vector<16x128xi32>
        %c0_18 = arith.constant 0 : index
        %35 = memref.load %arg2[%c0_18] : memref<1xi32, #tpu.memory_space<smem>>
        %36 = vector.broadcast %35 : i32 to vector<16x128xi32>
        %37 = arith.cmpi slt, %34, %36 : vector<16x128xi32>
        %cst_19 = arith.constant 0.000000e+00 : f32
        %38 = vector.broadcast %cst_19 : f32 to vector<16x128xf32>
        %39 = arith.select %37, %14, %38 : vector<16x128xi1>, vector<16x128xf32>
        %c0_20 = arith.constant 0 : index
        %c0_21 = arith.constant 0 : index
        %40 = vector.load %arg15[%c0_20, %c0_21] : memref<1x128xf32, #tpu.memory_space<vmem>>, vector<1x128xf32>
        %cst_22 = arith.constant dense<0.000000e+00> : vector<128xf32>
        %41 = vector.multi_reduction <add>, %39, %cst_22 [0] : vector<16x128xf32> to vector<128xf32>
        %42 = vector.shape_cast %41 : vector<128xf32> to vector<1x128xf32>
        %43 = arith.addf %40, %42 : vector<1x128xf32>
        %c0_23 = arith.constant 0 : index
        %c0_24 = arith.constant 0 : index
        %44 = vector.load %arg15[%c0_23, %c0_24] : memref<1x128xf32, #tpu.memory_space<vmem>>, vector<1x128xf32>
        tpu.vector_store %arg15[%c0_23, %c0_24], %43 {strides = array<i32>} : memref<1x128xf32, #tpu.memory_space<vmem>>, vector<1x128xf32>,
        %c0_25 = arith.constant 0 : index
        %c0_26 = arith.constant 0 : index
        %45 = vector.load %arg16[%c0_25, %c0_26] : memref<1x128xf32, #tpu.memory_space<vmem>>, vector<1x128xf32>
        %46 = arith.mulf %39, %39 : vector<16x128xf32>
        %cst_27 = arith.constant dense<0.000000e+00> : vector<128xf32>
        %47 = vector.multi_reduction <add>, %46, %cst_27 [0] : vector<16x128xf32> to vector<128xf32>
        %48 = vector.shape_cast %47 : vector<128xf32> to vector<1x128xf32>
        %49 = arith.addf %45, %48 : vector<1x128xf32>
        %c0_28 = arith.constant 0 : index
        %c0_29 = arith.constant 0 : index
        %50 = vector.load %arg16[%c0_28, %c0_29] : memref<1x128xf32, #tpu.memory_space<vmem>>, vector<1x128xf32>
        tpu.vector_store %arg16[%c0_28, %c0_29], %49 {strides = array<i32>} : memref<1x128xf32, #tpu.memory_space<vmem>>, vector<1x128xf32>,
      } else {
      }
      %true = arith.constant true
      %25 = arith.xori %22, %true : i1
      %26 = arith.extui %25 : i1 to i32
      %c0_i32_14 = arith.constant 0 : i32
      %27 = arith.cmpi ne, %26, %c0_i32_14 : i32
      scf.if %27 {
        %c0_17 = arith.constant 0 : index
        %c0_18 = arith.constant 0 : index
        %31 = vector.load %arg15[%c0_17, %c0_18] : memref<1x128xf32, #tpu.memory_space<vmem>>, vector<1x128xf32>
        %cst_19 = arith.constant dense<0.000000e+00> : vector<128xf32>
        %32 = vector.multi_reduction <add>, %14, %cst_19 [0] : vector<16x128xf32> to vector<128xf32>
        %33 = vector.shape_cast %32 : vector<128xf32> to vector<1x128xf32>
        %34 = arith.addf %31, %33 : vector<1x128xf32>
        %c0_20 = arith.constant 0 : index
        %c0_21 = arith.constant 0 : index
        %35 = vector.load %arg15[%c0_20, %c0_21] : memref<1x128xf32, #tpu.memory_space<vmem>>, vector<1x128xf32>
        tpu.vector_store %arg15[%c0_20, %c0_21], %34 {strides = array<i32>} : memref<1x128xf32, #tpu.memory_space<vmem>>, vector<1x128xf32>,
        %c0_22 = arith.constant 0 : index
        %c0_23 = arith.constant 0 : index
        %36 = vector.load %arg16[%c0_22, %c0_23] : memref<1x128xf32, #tpu.memory_space<vmem>>, vector<1x128xf32>
        %37 = arith.mulf %14, %14 : vector<16x128xf32>
        %cst_24 = arith.constant dense<0.000000e+00> : vector<128xf32>
        %38 = vector.multi_reduction <add>, %37, %cst_24 [0] : vector<16x128xf32> to vector<128xf32>
        %39 = vector.shape_cast %38 : vector<128xf32> to vector<1x128xf32>
        %40 = arith.addf %36, %39 : vector<1x128xf32>
        %c0_25 = arith.constant 0 : index
        %c0_26 = arith.constant 0 : index
        %41 = vector.load %arg16[%c0_25, %c0_26] : memref<1x128xf32, #tpu.memory_space<vmem>>, vector<1x128xf32>
        tpu.vector_store %arg16[%c0_25, %c0_26], %40 {strides = array<i32>} : memref<1x128xf32, #tpu.memory_space<vmem>>, vector<1x128xf32>,
      } else {
      }
      %c1_i32_15 = arith.constant 1 : i32
      %28 = arith.cmpi eq, %arg1, %c1_i32_15 : i32
      %29 = arith.extui %28 : i1 to i32
      %c0_i32_16 = arith.constant 0 : i32
      %30 = arith.cmpi ne, %29, %c0_i32_16 : i32
      scf.if %30 {
        %c0_17 = arith.constant 0 : index
        %31 = memref.load %arg2[%c0_17] : memref<1xi32, #tpu.memory_space<smem>>
        %32 = arith.sitofp %31 : i32 to f32
        %cst_18 = arith.constant 1.000000e+00 : f32
        %33 = arith.divf %cst_18, %32 : f32
        %c0_19 = arith.constant 0 : index
        %c0_20 = arith.constant 0 : index
        %34 = vector.load %arg15[%c0_19, %c0_20] : memref<1x128xf32, #tpu.memory_space<vmem>>, vector<1x128xf32>
        %35 = vector.broadcast %33 : f32 to vector<1x128xf32>
        %36 = arith.mulf %34, %35 : vector<1x128xf32>
        %c0_21 = arith.constant 0 : index
        %c0_22 = arith.constant 0 : index
        %37 = vector.load %arg16[%c0_21, %c0_22] : memref<1x128xf32, #tpu.memory_space<vmem>>, vector<1x128xf32>
        %38 = vector.broadcast %33 : f32 to vector<1x128xf32>
        %39 = arith.mulf %37, %38 : vector<1x128xf32>
        %40 = arith.mulf %36, %36 : vector<1x128xf32>
        %41 = arith.subf %39, %40 : vector<1x128xf32>
        %cst_23 = arith.constant 0.000000e+00 : f32
        %42 = vector.broadcast %cst_23 : f32 to vector<1x128xf32>
        %43 = arith.maximumf %41, %42 : vector<1x128xf32>
        %c0_24 = arith.constant 0 : index
        %c0_25 = arith.constant 0 : index
        %44 = vector.load %arg6[%c0_24, %c0_25] : memref<1x128xf32, #tpu.memory_space<vmem>>, vector<1x128xf32>
        %cst_26 = arith.constant 9.99999974E-6 : f32
        %45 = vector.broadcast %cst_26 : f32 to vector<1x128xf32>
        %46 = arith.addf %43, %45 : vector<1x128xf32>
        %47 = math.rsqrt %46 : vector<1x128xf32>
        %48 = arith.mulf %44, %47 : vector<1x128xf32>
        %c0_27 = arith.constant 0 : index
        %c0_28 = arith.constant 0 : index
        %49 = vector.load %arg17[%c0_27, %c0_28] : memref<1x128xf32, #tpu.memory_space<vmem>>, vector<1x128xf32>
        tpu.vector_store %arg17[%c0_27, %c0_28], %48 {strides = array<i32>} : memref<1x128xf32, #tpu.memory_space<vmem>>, vector<1x128xf32>,
        %c0_29 = arith.constant 0 : index
        %c0_30 = arith.constant 0 : index
        %50 = vector.load %arg7[%c0_29, %c0_30] : memref<1x128xf32, #tpu.memory_space<vmem>>, vector<1x128xf32>
        %51 = arith.mulf %36, %48 : vector<1x128xf32>
        %52 = arith.subf %50, %51 : vector<1x128xf32>
        %c0_31 = arith.constant 0 : index
        %c0_32 = arith.constant 0 : index
        %53 = vector.load %arg18[%c0_31, %c0_32] : memref<1x128xf32, #tpu.memory_space<vmem>>, vector<1x128xf32>
        tpu.vector_store %arg18[%c0_31, %c0_32], %52 {strides = array<i32>} : memref<1x128xf32, #tpu.memory_space<vmem>>, vector<1x128xf32>,
      } else {
      }
    } else {
    }
    %c1_i32 = arith.constant 1 : i32
    %3 = arith.cmpi eq, %arg0, %c1_i32 : i32
    %4 = arith.extui %3 : i1 to i32
    %c0_i32_1 = arith.constant 0 : i32
    %5 = arith.cmpi ne, %4, %c0_i32_1 : i32
    scf.if %5 {
      %c16_i32 = arith.constant 16 : i32
      %6 = arith.muli %arg1, %c16_i32 : i32
      %7 = tpu.assume_multiple %6, 8 : i32
      %8 = arith.index_cast %7 : i32 to index
      %c0 = arith.constant 0 : index
      %9 = vector.load %arg14[%8, %c0] : memref<32x128xf32, #tpu.memory_space<vmem>>, vector<16x128xf32>
      %c0_2 = arith.constant 0 : index
      %c0_3 = arith.constant 0 : index
      %10 = vector.load %arg17[%c0_2, %c0_3] : memref<1x128xf32, #tpu.memory_space<vmem>>, vector<1x128xf32>
      %c0_4 = arith.constant 0 : index
      %c0_5 = arith.constant 0 : index
      %11 = vector.load %arg18[%c0_4, %c0_5] : memref<1x128xf32, #tpu.memory_space<vmem>>, vector<1x128xf32>
      %c0_6 = arith.constant 0 : index
      %c0_7 = arith.constant 0 : index
      %12 = memref.load %arg8[%c0_6, %c0_7] : memref<1x1xf32, #tpu.memory_space<smem>>
      %c0_8 = arith.constant 0 : index
      %c0_9 = arith.constant 0 : index
      %13 = vector.load %arg9[%c0_8, %c0_9] : memref<128x128xf32, #tpu.memory_space<vmem>>, vector<128x128xf32>
      %c0_10 = arith.constant 0 : index
      %c0_11 = arith.constant 0 : index
      %14 = vector.load %arg10[%c0_10, %c0_11] : memref<1x128xf32, #tpu.memory_space<vmem>>, vector<1x128xf32>
      %15 = vector.broadcast %10 : vector<1x128xf32> to vector<16x128xf32>
      %16 = arith.mulf %9, %15 : vector<16x128xf32>
      %17 = vector.broadcast %11 : vector<1x128xf32> to vector<16x128xf32>
      %18 = arith.addf %16, %17 : vector<16x128xf32>
      %cst = arith.constant 0.000000e+00 : f32
      %19 = vector.broadcast %cst : f32 to vector<16x128xf32>
      %20 = arith.cmpf oge, %18, %19 : vector<16x128xf32>
      %21 = vector.broadcast %12 : f32 to vector<16x128xf32>
      %22 = arith.mulf %21, %18 : vector<16x128xf32>
      %23 = arith.select %20, %18, %22 : vector<16x128xi1>, vector<16x128xf32>
      %cst_12 = arith.constant dense<0.000000e+00> : vector<16x128xf32>
      %24 = tpu.matmul %23, %13, %cst_12 {dimension_numbers = #tpu.dot_dimension_numbers<[1], [0], [0], [1], [0, 0, 1, 1], [], []>} : vector<16x128xf32>, vector<128x128xf32>, vector<16x128xf32> -> vector<16x128xf32>
      %25 = vector.broadcast %14 : vector<1x128xf32> to vector<16x128xf32>
      %26 = arith.addf %24, %25 : vector<16x128xf32>
      %cst_13 = arith.constant dense<0xFF800000> : vector<16xf32>
      %27 = vector.multi_reduction <maximumf>, %26, %cst_13 [1] : vector<16x128xf32> to vector<16xf32>
      %28 = vector.shape_cast %27 : vector<16xf32> to vector<16x1xf32>
      %29 = vector.broadcast %28 : vector<16x1xf32> to vector<16x128xf32>
      %30 = arith.subf %26, %29 : vector<16x128xf32>
      %31 = math.exp %30 : vector<16x128xf32>
      %cst_14 = arith.constant dense<0.000000e+00> : vector<16xf32>
      %32 = vector.multi_reduction <add>, %31, %cst_14 [1] : vector<16x128xf32> to vector<16xf32>
      %33 = vector.shape_cast %32 : vector<16xf32> to vector<16x1xf32>
      %34 = tpu.reciprocal %33 : vector<16x1xf32> -> vector<16x1xf32>
      %35 = vector.broadcast %34 : vector<16x1xf32> to vector<16x128xf32>
      %36 = arith.mulf %31, %35 : vector<16x128xf32>
      %37 = math.log %33 : vector<16x1xf32>
      %38 = vector.broadcast %37 : vector<16x1xf32> to vector<16x128xf32>
      %39 = arith.subf %30, %38 : vector<16x128xf32>
      %40 = vector.extract_strided_slice %39 {offsets = [0, 0], sizes = [16, 38], strides = [1, 1]} : vector<16x128xf32> to vector<16x38xf32>
      %41 = vector.extract_strided_slice %23 {offsets = [0, 0], sizes = [16, 100], strides = [1, 1]} : vector<16x128xf32> to vector<16x100xf32>
      %42 = vector.extract_strided_slice %36 {offsets = [0, 0], sizes = [16, 38], strides = [1, 1]} : vector<16x128xf32> to vector<16x38xf32>
      %c0_15 = arith.constant 0 : index
      %c0_16 = arith.constant 0 : index
      %43 = vector.load %arg11[%c0_15, %c0_16] : memref<16x38xf32, #tpu.memory_space<vmem>>, vector<16x38xf32>
      tpu.vector_store %arg11[%c0_15, %c0_16], %40 {strides = array<i32>} : memref<16x38xf32, #tpu.memory_space<vmem>>, vector<16x38xf32>,
      %c0_17 = arith.constant 0 : index
      %c0_18 = arith.constant 0 : index
      %44 = vector.load %arg12[%c0_17, %c0_18] : memref<16x100xf32, #tpu.memory_space<vmem>>, vector<16x100xf32>
      tpu.vector_store %arg12[%c0_17, %c0_18], %41 {strides = array<i32>} : memref<16x100xf32, #tpu.memory_space<vmem>>, vector<16x100xf32>,
      %c0_19 = arith.constant 0 : index
      %c0_20 = arith.constant 0 : index
      %45 = vector.load %arg13[%c0_19, %c0_20] : memref<16x38xf32, #tpu.memory_space<vmem>>, vector<16x38xf32>
      tpu.vector_store %arg13[%c0_19, %c0_20], %42 {strides = array<i32>} : memref<16x38xf32, #tpu.memory_space<vmem>>, vector<16x38xf32>,
    } else {
    }
    return
  }
  func.func @transform_0(%arg0: i32, %arg1: i32, %arg2: memref<1xi32, #tpu.memory_space<smem>>) -> (i32, i32) {
    %c1_i32 = arith.constant 1 : i32
    %0 = arith.subi %c1_i32, %arg0 : i32
    %1 = arith.muli %0, %arg1 : i32
    %c1_i32_0 = arith.constant 1 : i32
    %2 = arith.muli %arg0, %c1_i32_0 : i32
    %3 = arith.addi %1, %2 : i32
    %c0_i32 = arith.constant 0 : i32
    %c0_i32_1 = arith.constant 0 : i32
    return %3, %c0_i32 : i32, i32
  }
  func.func @transform_1(%arg0: i32, %arg1: i32, %arg2: memref<1xi32, #tpu.memory_space<smem>>) -> (i32, i32) {
    %c0_i32 = arith.constant 0 : i32
    %c0_i32_0 = arith.constant 0 : i32
    %c0_i32_1 = arith.constant 0 : i32
    return %c0_i32, %c0_i32_0 : i32, i32
  }
  func.func @transform_2(%arg0: i32, %arg1: i32, %arg2: memref<1xi32, #tpu.memory_space<smem>>) -> (i32, i32) {
    %c0_i32 = arith.constant 0 : i32
    %c0_i32_0 = arith.constant 0 : i32
    %c0_i32_1 = arith.constant 0 : i32
    return %c0_i32, %c0_i32_0 : i32, i32
  }
  func.func @transform_3(%arg0: i32, %arg1: i32, %arg2: memref<1xi32, #tpu.memory_space<smem>>) -> (i32, i32) {
    %c0_i32 = arith.constant 0 : i32
    %c0_i32_0 = arith.constant 0 : i32
    %c0_i32_1 = arith.constant 0 : i32
    return %c0_i32, %c0_i32_0 : i32, i32
  }
  func.func @transform_4(%arg0: i32, %arg1: i32, %arg2: memref<1xi32, #tpu.memory_space<smem>>) -> (i32, i32) {
    %c0_i32 = arith.constant 0 : i32
    %c0_i32_0 = arith.constant 0 : i32
    %c0_i32_1 = arith.constant 0 : i32
    return %c0_i32, %c0_i32_0 : i32, i32
  }
  func.func @transform_5(%arg0: i32, %arg1: i32, %arg2: memref<1xi32, #tpu.memory_space<smem>>) -> (i32, i32) {
    %c0_i32 = arith.constant 0 : i32
    %c0_i32_0 = arith.constant 0 : i32
    %c0_i32_1 = arith.constant 0 : i32
    return %c0_i32, %c0_i32_0 : i32, i32
  }
  func.func @transform_6(%arg0: i32, %arg1: i32, %arg2: memref<1xi32, #tpu.memory_space<smem>>) -> (i32, i32) {
    %c0_i32 = arith.constant 0 : i32
    %c0_i32_0 = arith.constant 0 : i32
    %c0_i32_1 = arith.constant 0 : i32
    return %c0_i32, %c0_i32_0 : i32, i32
  }
  func.func @transform_7(%arg0: i32, %arg1: i32, %arg2: memref<1xi32, #tpu.memory_space<smem>>) -> (i32, i32) {
    %c0_i32 = arith.constant 0 : i32
    %c0_i32_0 = arith.constant 0 : i32
    %c0_i32_1 = arith.constant 0 : i32
    return %c0_i32, %c0_i32_0 : i32, i32
  }
  func.func @transform_8(%arg0: i32, %arg1: i32, %arg2: memref<1xi32, #tpu.memory_space<smem>>) -> (i32, i32) {
    %0 = arith.muli %arg0, %arg1 : i32
    %c0_i32 = arith.constant 0 : i32
    %c0_i32_0 = arith.constant 0 : i32
    return %0, %c0_i32 : i32, i32
  }
  func.func @transform_9(%arg0: i32, %arg1: i32, %arg2: memref<1xi32, #tpu.memory_space<smem>>) -> (i32, i32) {
    %0 = arith.muli %arg0, %arg1 : i32
    %c0_i32 = arith.constant 0 : i32
    %c0_i32_0 = arith.constant 0 : i32
    return %0, %c0_i32 : i32, i32
  }
  func.func @transform_10(%arg0: i32, %arg1: i32, %arg2: memref<1xi32, #tpu.memory_space<smem>>) -> (i32, i32) {
    %0 = arith.muli %arg0, %arg1 : i32
    %c0_i32 = arith.constant 0 : i32
    %c0_i32_0 = arith.constant 0 : i32
    return %0, %c0_i32 : i32, i32
  }
}

</mosaic_0001>

<llo_original>
// kernel: extended_yaleb_net.1
$region0: #{extended_yaleb_net.1}
  #allocation0 [shape = 'u32[]', space=smem, size = 0x4, offset = 0x4, fixed_abs, tag = 'smem constant byte address 0x4 - core index']
  #allocation1 [shape = 'u32[72,128]{1,0:T(1,128)}', space=vmem, size = 0x9000, scoped, tag = 'internal scratch']
  #allocation2 [shape = 'f32[32,128]{1,0:T(8,128)}', space=vmem, size = 0x4000, scoped, tag = 'scratch operand']
  #allocation3 [shape = 'f32[1,128]{1,0:T(1,128)}', space=vmem, size = 0x200, scoped, tag = 'scratch operand']
  #allocation4 [shape = 'f32[1,128]{1,0:T(1,128)}', space=vmem, size = 0x200, scoped, tag = 'scratch operand']
  #allocation5 [shape = 'f32[1,128]{1,0:T(1,128)}', space=vmem, size = 0x200, scoped, tag = 'scratch operand']
  #allocation6 [shape = 'f32[1,128]{1,0:T(1,128)}', space=vmem, size = 0x200, scoped, tag = 'scratch operand']
  #allocation7 [shape = 's32[1]{0}', space=sflag, size = 0x4, scoped, tag = 'scoped memory for extended_yaleb_net.1']
  #allocation8 [shape = 's32[1]{0:T(128)S(6)}', space=smem, size = 0x200, scoped, tag = 'prefetched SMEM operand 0']
  #allocation9 [shape = 'f32[1,1]{1,0:T(1,128)S(6)}', space=smem, size = 0x200, scoped, tag = 'scoped memory for extended_yaleb_net.1']
  %s0 = inlined_call_operand.<no memory space> [shape: s32[1], index: 0, kind: input, shape index: {}]
  %s1 = inlined_call_operand.vmem [shape: f32[20,504], index: 1, kind: input, shape index: {}]
  %s2 = inlined_call_operand.vmem [shape: f32[504,128], index: 2, kind: input, shape index: {}]
  %s3 = inlined_call_operand.vmem [shape: f32[1,128], index: 3, kind: input, shape index: {}]
  %s4 = inlined_call_operand.vmem [shape: f32[1,128], index: 4, kind: input, shape index: {}]
  %s5 = inlined_call_operand.vmem [shape: f32[1,128], index: 5, kind: input, shape index: {}]
  %s6 = inlined_call_operand.<no memory space> [shape: f32[1,1], index: 6, kind: input, shape index: {}]
  %s7 = inlined_call_operand.vmem [shape: f32[128,128], index: 7, kind: input, shape index: {}]
  %s8 = inlined_call_operand.vmem [shape: f32[1,128], index: 8, kind: input, shape index: {}]
  %s9 = inlined_call_operand.hbm [shape: f32[20,38], index: 9, kind: output, shape index: {0}]
  %s10 = inlined_call_operand.hbm [shape: f32[20,100], index: 10, kind: output, shape index: {1}]
  %s11 = inlined_call_operand.hbm [shape: f32[20,38], index: 11, kind: output, shape index: {2}]
  %12 = xla_tuple %s9, %s10, %s11
  %s13 = sld [smem:[#allocation0]]
  $region105: #{extended_yaleb_net.1} parent=0
    _
  %s15 = ssub.s32 1, %s13
  %s16 = scalar_select 0, %s15, %s13
  %17 = sst [smem:[#allocation8]] %s0
  %18 = sst [smem:[#allocation9]] %s6
  $region1: #{extended_yaleb_net.1} parent=0
    #allocation10 [shape = 'u8[16384]{0}', space=vmem, size = 0x4000, scoped, tag = 'output window, operand 0']
    #allocation11 [shape = 's32[2]{0}', space=sflag, size = 0x8, scoped, tag = 'scoped memory for extended_yaleb_net.1']
    #allocation12 [shape = 'u8[16384]{0}', space=vmem, size = 0x4000, scoped, tag = 'output window, operand 1']
    #allocation13 [shape = 's32[2]{0}', space=sflag, size = 0x8, scoped, tag = 'scoped memory for extended_yaleb_net.1']
    #allocation14 [shape = 'u8[16384]{0}', space=vmem, size = 0x4000, scoped, tag = 'output window, operand 2']
    %19 = vsyncpa [#allocation11], 0
    %s20 = scalar_lea.sflag [#allocation11], 1
    %21 = vsyncpa %s20, 0
    %22 = vsyncpa [#allocation13], 0
    %s23 = scalar_lea.sflag [#allocation13], 1
    %24 = vsyncpa %s23, 0
    loop: start=0, step=1, limit=6
    $region2: #{extended_yaleb_net.1} parent=1 // loop_pre_header
      _
    $region3: #{extended_yaleb_net.1} parent=1 // loop_header
      %s26 = sphi 0, %s30
      %p27 = scmp.ge.s32.totalorder %s26, 6
      %s33 = sphi 0, %s45
      %s34 = sphi 0, %s41
      %s35 = sphi 0, %s33
      %s36 = sphi 0, %s34
      %s37 = sphi 0, %s35
      %s38 = sphi 0, %s36
      %s54 = sphi 0, %s56
      %s57 = sphi 0, %s54
      %s58 = sphi 0, %s57
      %s74 = sphi 0, %s58
      %s78 = sphi 0, %s78
      %s80 = sphi 0, %s78
      %s81 = sphi 0, %s80
      %s95 = sphi 0, %s81
      %s99 = sphi 0, %s99
      %s101 = sphi 0, %s99
      %s102 = sphi 0, %s101
      %s116 = sphi 0, %s102
      %s120 = sphi 0, %s120
      %s122 = sphi 0, %s120
      %s123 = sphi 0, %s122
      %s137 = sphi 0, %s123
      %s141 = sphi 0, %s141
      %s143 = sphi 0, %s141
      %s144 = sphi 0, %s143
      %s158 = sphi 0, %s144
      %s162 = sphi 0, %s162
      %s164 = sphi 0, %s162
      %s165 = sphi 0, %s164
      %s179 = sphi 0, %s165
      %s183 = sphi 0, %s183
      %s185 = sphi 0, %s183
      %s186 = sphi 0, %s185
      %s200 = sphi 0, %s186
      %s204 = sphi 0, %s204
      %s206 = sphi 0, %s204
      %s207 = sphi 0, %s206
      %s221 = sphi 0, %s207
      %s229 = sphi 0, %s231
      %s232 = sphi 0, %s229
      %s233 = sphi 0, %s232
      %s249 = sphi 0, %s233
      %s257 = sphi 0, %s259
      %s260 = sphi 0, %s257
      %s261 = sphi 0, %s260
      %s277 = sphi 0, %s261
      %s285 = sphi 0, %s287
      %s288 = sphi 0, %s285
      %s289 = sphi 0, %s288
      %s305 = sphi 0, %s289
    $region4: #{extended_yaleb_net.1} parent=1 // loop_header_branch
      %29 = sbr.rel (%p27) target = $region8
    $region5: #{extended_yaleb_net.1} parent=1 // loop_body
      %s31 = ssub.s32 %s26, 1
      %s32 = ssub.s32 %s26, 2
      %s39 = sadd.s32 1, %s34
      %p40 = scmp.ge.s32.totalorder %s39, 2
      %s41 = scalar_select %p40, 0, %s39
      %s42 = sadd.s32 1, %s33
      %s43 = scalar_select %p40, %s42, %s33
      %p44 = scmp.ge.s32.totalorder %s43, 2
      %s45 = scalar_select %p44, 0, %s43
      %s46 = ssub.s32 1, %s33
      %s47 = smul.u32 %s46, %s34
      %s48 = sadd.s32 %s47, %s33
      %s49 = ssub.s32 1, %s45
      %s50 = smul.u32 %s49, %s41
      %s51 = sadd.s32 %s50, %s45
      %s52 = ssub.s32 %s48, %s51
      %p53 = scmp.eq.s32.totalorder %s52, 0
      %s55 = sadd.s32 %s54, 1
      %s56 = scalar_select %p53, %s54, %s55
      %p59 = pneg %p53
      %p60 = scmp.eq.s32.totalorder %s26, 3
      %p61 = por %p59, %p60
      %p62 = scmp.ne.s32.totalorder %s54, %s57
      %p63 = scmp.eq.s32.totalorder %s26, 0
      %p64 = por %p62, %p63
      %p65 = scmp.ne.s32.totalorder %s54, %s57
      %p66 = scmp.eq.s32.totalorder %s31, 3
      %p67 = por %p65, %p66
      %p68 = scmp.ne.s32.totalorder %s57, %s58
      %p69 = scmp.eq.s32.totalorder %s31, 0
      %p70 = por %p68, %p69
      %p71 = scmp.ne.s32.totalorder %s57, %s58
      %p72 = scmp.eq.s32.totalorder %s32, 3
      %p73 = por %p71, %p72
      %p75 = scmp.ne.s32.totalorder %s58, %s74
      %p76 = scmp.eq.s32.totalorder %s32, 0
      %p77 = por %p75, %p76
      %s79 = sadd.s32 %s78, 1
      %p82 = scmp.eq.s32.totalorder %s26, 3
      %p83 = scmp.ne.s32.totalorder %s78, %s80
      %p84 = scmp.eq.s32.totalorder %s26, 0
      %p85 = por %p83, %p84
      %p86 = scmp.ne.s32.totalorder %s78, %s80
      %p87 = scmp.eq.s32.totalorder %s31, 3
      %p88 = por %p86, %p87
      %p89 = scmp.ne.s32.totalorder %s80, %s81
      %p90 = scmp.eq.s32.totalorder %s31, 0
      %p91 = por %p89, %p90
      %p92 = scmp.ne.s32.totalorder %s80, %s81
      %p93 = scmp.eq.s32.totalorder %s32, 3
      %p94 = por %p92, %p93
      %p96 = scmp.ne.s32.totalorder %s81, %s95
      %p97 = scmp.eq.s32.totalorder %s32, 0
      %p98 = por %p96, %p97
      %s100 = sadd.s32 %s99, 1
      %p103 = scmp.eq.s32.totalorder %s26, 3
      %p104 = scmp.ne.s32.totalorder %s99, %s101
      %p105 = scmp.eq.s32.totalorder %s26, 0
      %p106 = por %p104, %p105
      %p107 = scmp.ne.s32.totalorder %s99, %s101
      %p108 = scmp.eq.s32.totalorder %s31, 3
      %p109 = por %p107, %p108
      %p110 = scmp.ne.s32.totalorder %s101, %s102
      %p111 = scmp.eq.s32.totalorder %s31, 0
      %p112 = por %p110, %p111
      %p113 = scmp.ne.s32.totalorder %s101, %s102
      %p114 = scmp.eq.s32.totalorder %s32, 3
      %p115 = por %p113, %p114
      %p117 = scmp.ne.s32.totalorder %s102, %s116
      %p118 = scmp.eq.s32.totalorder %s32, 0
      %p119 = por %p117, %p118
      %s121 = sadd.s32 %s120, 1
      %p124 = scmp.eq.s32.totalorder %s26, 3
      %p125 = scmp.ne.s32.totalorder %s120, %s122
      %p126 = scmp.eq.s32.totalorder %s26, 0
      %p127 = por %p125, %p126
      %p128 = scmp.ne.s32.totalorder %s120, %s122
      %p129 = scmp.eq.s32.totalorder %s31, 3
      %p130 = por %p128, %p129
      %p131 = scmp.ne.s32.totalorder %s122, %s123
      %p132 = scmp.eq.s32.totalorder %s31, 0
      %p133 = por %p131, %p132
      %p134 = scmp.ne.s32.totalorder %s122, %s123
      %p135 = scmp.eq.s32.totalorder %s32, 3
      %p136 = por %p134, %p135
      %p138 = scmp.ne.s32.totalorder %s123, %s137
      %p139 = scmp.eq.s32.totalorder %s32, 0
      %p140 = por %p138, %p139
      %s142 = sadd.s32 %s141, 1
      %p145 = scmp.eq.s32.totalorder %s26, 3
      %p146 = scmp.ne.s32.totalorder %s141, %s143
      %p147 = scmp.eq.s32.totalorder %s26, 0
      %p148 = por %p146, %p147
      %p149 = scmp.ne.s32.totalorder %s141, %s143
      %p150 = scmp.eq.s32.totalorder %s31, 3
      %p151 = por %p149, %p150
      %p152 = scmp.ne.s32.totalorder %s143, %s144
      %p153 = scmp.eq.s32.totalorder %s31, 0
      %p154 = por %p152, %p153
      %p155 = scmp.ne.s32.totalorder %s143, %s144
      %p156 = scmp.eq.s32.totalorder %s32, 3
      %p157 = por %p155, %p156
      %p159 = scmp.ne.s32.totalorder %s144, %s158
      %p160 = scmp.eq.s32.totalorder %s32, 0
      %p161 = por %p159, %p160
      %s163 = sadd.s32 %s162, 1
      %p166 = scmp.eq.s32.totalorder %s26, 3
      %p167 = scmp.ne.s32.totalorder %s162, %s164
      %p168 = scmp.eq.s32.totalorder %s26, 0
      %p169 = por %p167, %p168
      %p170 = scmp.ne.s32.totalorder %s162, %s164
      %p171 = scmp.eq.s32.totalorder %s31, 3
      %p172 = por %p170, %p171
      %p173 = scmp.ne.s32.totalorder %s164, %s165
      %p174 = scmp.eq.s32.totalorder %s31, 0
      %p175 = por %p173, %p174
      %p176 = scmp.ne.s32.totalorder %s164, %s165
      %p177 = scmp.eq.s32.totalorder %s32, 3
      %p178 = por %p176, %p177
      %p180 = scmp.ne.s32.totalorder %s165, %s179
      %p181 = scmp.eq.s32.totalorder %s32, 0
      %p182 = por %p180, %p181
      %s184 = sadd.s32 %s183, 1
      %p187 = scmp.eq.s32.totalorder %s26, 3
      %p188 = scmp.ne.s32.totalorder %s183, %s185
      %p189 = scmp.eq.s32.totalorder %s26, 0
      %p190 = por %p188, %p189
      %p191 = scmp.ne.s32.totalorder %s183, %s185
      %p192 = scmp.eq.s32.totalorder %s31, 3
      %p193 = por %p191, %p192
      %p194 = scmp.ne.s32.totalorder %s185, %s186
      %p195 = scmp.eq.s32.totalorder %s31, 0
      %p196 = por %p194, %p195
      %p197 = scmp.ne.s32.totalorder %s185, %s186
      %p198 = scmp.eq.s32.totalorder %s32, 3
      %p199 = por %p197, %p198
      %p201 = scmp.ne.s32.totalorder %s186, %s200
      %p202 = scmp.eq.s32.totalorder %s32, 0
      %p203 = por %p201, %p202
      %s205 = sadd.s32 %s204, 1
      %p208 = scmp.eq.s32.totalorder %s26, 3
      %p209 = scmp.ne.s32.totalorder %s204, %s206
      %p210 = scmp.eq.s32.totalorder %s26, 0
      %p211 = por %p209, %p210
      %p212 = scmp.ne.s32.totalorder %s204, %s206
      %p213 = scmp.eq.s32.totalorder %s31, 3
      %p214 = por %p212, %p213
      %p215 = scmp.ne.s32.totalorder %s206, %s207
      %p216 = scmp.eq.s32.totalorder %s31, 0
      %p217 = por %p215, %p216
      %p218 = scmp.ne.s32.totalorder %s206, %s207
      %p219 = scmp.eq.s32.totalorder %s32, 3
      %p220 = por %p218, %p219
      %p222 = scmp.ne.s32.totalorder %s207, %s221
      %p223 = scmp.eq.s32.totalorder %s32, 0
      %p224 = por %p222, %p223
      %s225 = smul.u32 %s33, %s34
      %s226 = smul.u32 %s45, %s41
      %s227 = ssub.s32 %s225, %s226
      %p228 = scmp.eq.s32.totalorder %s227, 0
      %s230 = sadd.s32 %s229, 1
      %s231 = scalar_select %p228, %s229, %s230
      %p234 = pneg %p228
      %p235 = scmp.eq.s32.totalorder %s26, 3
      %p236 = por %p234, %p235
      %p237 = scmp.ne.s32.totalorder %s229, %s232
      %p238 = scmp.eq.s32.totalorder %s26, 0
      %p239 = por %p237, %p238
      %p240 = scmp.ne.s32.totalorder %s229, %s232
      %p241 = scmp.eq.s32.totalorder %s31, 3
      %p242 = por %p240, %p241
      %p243 = scmp.ne.s32.totalorder %s232, %s233
      %p244 = scmp.eq.s32.totalorder %s31, 0
      %p245 = por %p243, %p244
      %p246 = scmp.ne.s32.totalorder %s232, %s233
      %p247 = scmp.eq.s32.totalorder %s32, 3
      %p248 = por %p246, %p247
      %p250 = scmp.ne.s32.totalorder %s233, %s249
      %p251 = scmp.eq.s32.totalorder %s32, 0
      %p252 = por %p250, %p251
      %s253 = smul.u32 %s33, %s34
      %s254 = smul.u32 %s45, %s41
      %s255 = ssub.s32 %s253, %s254
      %p256 = scmp.eq.s32.totalorder %s255, 0
      %s258 = sadd.s32 %s257, 1
      %s259 = scalar_select %p256, %s257, %s258
      %p262 = pneg %p256
      %p263 = scmp.eq.s32.totalorder %s26, 3
      %p264 = por %p262, %p263
      %p265 = scmp.ne.s32.totalorder %s257, %s260
      %p266 = scmp.eq.s32.totalorder %s26, 0
      %p267 = por %p265, %p266
      %p268 = scmp.ne.s32.totalorder %s257, %s260
      %p269 = scmp.eq.s32.totalorder %s31, 3
      %p270 = por %p268, %p269
      %p271 = scmp.ne.s32.totalorder %s260, %s261
      %p272 = scmp.eq.s32.totalorder %s31, 0
      %p273 = por %p271, %p272
      %p274 = scmp.ne.s32.totalorder %s260, %s261
      %p275 = scmp.eq.s32.totalorder %s32, 3
      %p276 = por %p274, %p275
      %p278 = scmp.ne.s32.totalorder %s261, %s277
      %p279 = scmp.eq.s32.totalorder %s32, 0
      %p280 = por %p278, %p279
      %s281 = smul.u32 %s33, %s34
      %s282 = smul.u32 %s45, %s41
      %s283 = ssub.s32 %s281, %s282
      %p284 = scmp.eq.s32.totalorder %s283, 0
      %s286 = sadd.s32 %s285, 1
      %s287 = scalar_select %p284, %s285, %s286
      %p290 = pneg %p284
      %p291 = scmp.eq.s32.totalorder %s26, 3
      %p292 = por %p290, %p291
      %p293 = scmp.ne.s32.totalorder %s285, %s288
      %p294 = scmp.eq.s32.totalorder %s26, 0
      %p295 = por %p293, %p294
      %p296 = scmp.ne.s32.totalorder %s285, %s288
      %p297 = scmp.eq.s32.totalorder %s31, 3
      %p298 = por %p296, %p297
      %p299 = scmp.ne.s32.totalorder %s288, %s289
      %p300 = scmp.eq.s32.totalorder %s31, 0
      %p301 = por %p299, %p300
      %p302 = scmp.ne.s32.totalorder %s288, %s289
      %p303 = scmp.eq.s32.totalorder %s32, 3
      %p304 = por %p302, %p303
      %p306 = scmp.ne.s32.totalorder %s289, %s305
      %p307 = scmp.eq.s32.totalorder %s32, 0
      %p308 = por %p306, %p307
      %p309 = scmp.le.s32.totalorder 1, %s26
      %p310 = scmp.lt.s32.totalorder %s26, 5
      %p311 = pnand %p309, %p310
      %p312 = pneg %p311
      // Predicated region
      $region9: #{extended_yaleb_net.1} parent=5 // pred_check
        _
      $region10: #{extended_yaleb_net.1} parent=5 // pred_check_branch
        %314 = sbr.rel (%p311) target = $region12
      $region11: #{extended_yaleb_net.1} parent=5 // pred_region
        %s315 = ssub.s32 %s26, 1
        // Predicated region
        $region13: #{extended_yaleb_net.1} parent=11 // pred_check
          %p316 = pneg %p91
        $region14: #{extended_yaleb_net.1} parent=11 // pred_check_branch
          %318 = sbr.rel (%p316) target = $region16
        $region15: #{extended_yaleb_net.1} parent=11 // pred_region
          _
        $region16: #{extended_yaleb_net.1} parent=11 // pred_fallthru
          _
        // Predicated region
        $region17: #{extended_yaleb_net.1} parent=11 // pred_check
          %p319 = pneg %p112
        $region18: #{extended_yaleb_net.1} parent=11 // pred_check_branch
          %321 = sbr.rel (%p319) target = $region20
        $region19: #{extended_yaleb_net.1} parent=11 // pred_region
          _
        $region20: #{extended_yaleb_net.1} parent=11 // pred_fallthru
          _
        // Predicated region
        $region21: #{extended_yaleb_net.1} parent=11 // pred_check
          %p322 = pneg %p133
        $region22: #{extended_yaleb_net.1} parent=11 // pred_check_branch
          %324 = sbr.rel (%p322) target = $region24
        $region23: #{extended_yaleb_net.1} parent=11 // pred_region
          _
        $region24: #{extended_yaleb_net.1} parent=11 // pred_fallthru
          _
        // Predicated region
        $region25: #{extended_yaleb_net.1} parent=11 // pred_check
          %p325 = pneg %p154
        $region26: #{extended_yaleb_net.1} parent=11 // pred_check_branch
          %327 = sbr.rel (%p325) target = $region28
        $region27: #{extended_yaleb_net.1} parent=11 // pred_region
          _
        $region28: #{extended_yaleb_net.1} parent=11 // pred_fallthru
          _
        // Predicated region
        $region29: #{extended_yaleb_net.1} parent=11 // pred_check
          %p328 = pneg %p175
        $region30: #{extended_yaleb_net.1} parent=11 // pred_check_branch
          %330 = sbr.rel (%p328) target = $region32
        $region31: #{extended_yaleb_net.1} parent=11 // pred_region
          _
        $region32: #{extended_yaleb_net.1} parent=11 // pred_fallthru
          _
        // Predicated region
        $region33: #{extended_yaleb_net.1} parent=11 // pred_check
          %p331 = pneg %p196
        $region34: #{extended_yaleb_net.1} parent=11 // pred_check_branch
          %333 = sbr.rel (%p331) target = $region36
        $region35: #{extended_yaleb_net.1} parent=11 // pred_region
          _
        $region36: #{extended_yaleb_net.1} parent=11 // pred_fallthru
          _
        // Predicated region
        $region37: #{extended_yaleb_net.1} parent=11 // pred_check
          %p334 = pneg %p217
        $region38: #{extended_yaleb_net.1} parent=11 // pred_check_branch
          %336 = sbr.rel (%p334) target = $region40
        $region39: #{extended_yaleb_net.1} parent=11 // pred_region
          _
        $region40: #{extended_yaleb_net.1} parent=11 // pred_fallthru
          _
      $region12: #{extended_yaleb_net.1} parent=5 // pred_fallthru
        _
      %p337 = scmp.lt.s32.totalorder %s26, 4
      // Predicated region
      $region41: #{extended_yaleb_net.1} parent=5 // pred_check
        %p338 = pneg %p337
      $region42: #{extended_yaleb_net.1} parent=5 // pred_check_branch
        %340 = sbr.rel (%p338) target = $region44
      $region43: #{extended_yaleb_net.1} parent=5 // pred_region
        // Predicated region
        $region45: #{extended_yaleb_net.1} parent=43 // pred_check
          %p341 = pneg %p64
        $region46: #{extended_yaleb_net.1} parent=43 // pred_check_branch
          %343 = sbr.rel (%p341) target = $region48
        $region47: #{extended_yaleb_net.1} parent=43 // pred_region
          %s344 = ssub.s32 1, %s33
          %s345 = smul.u32 %s344, %s34
          %s346 = sadd.s32 %s345, %s33
          %s347 = smul.u32 2, %s346
          %s348 = ssub.s32 3, %s347
          %p349 = scmp.lt.s32.totalorder %s348, 2
          %s350 = scalar_select %p349, %s348, 2
          %s351 = smul.u32 8, %s350
          %s352 = smul.u32 %s351, 4
          %p353 = scmp.lt.s32.totalorder %s347, 2
          %s354 = scalar_select %p353, %s347, 2
          %s355 = smul.addr %s354, 4
          %s356 = smul.addr %s355, 8
          %s357 = scalar_lea.vmem %s1, %s356
          %s358 = ssub.s32 1, %s33
          %s359 = smul.u32 %s358, %s34
          %s360 = sadd.s32 %s359, %s33
          %s361 = smul.u32 2, %s360
          %s362 = ssub.s32 3, %s361
          %p363 = scmp.lt.s32.totalorder %s362, 2
          %s364 = scalar_select %p363, %s362, 2
          %s365 = smul.u32 8, %s364
          %s366 = smul.u32 %s365, 4
        $region48: #{extended_yaleb_net.1} parent=43 // pred_fallthru
          _
      $region44: #{extended_yaleb_net.1} parent=5 // pred_fallthru
        _
      %p367 = scmp.le.s32.totalorder 1, %s26
      %p368 = scmp.lt.s32.totalorder %s26, 5
      %p369 = pnand %p367, %p368
      %p370 = pneg %p369
      // Predicated region
      $region49: #{extended_yaleb_net.1} parent=5 // pred_check
        _
      $region50: #{extended_yaleb_net.1} parent=5 // pred_check_branch
        %372 = sbr.rel (%p369) target = $region52
      $region51: #{extended_yaleb_net.1} parent=5 // pred_region
        %s373 = ssub.s32 %s26, 1
        %s374 = ssub.s32 1, %s35
        %s375 = smul.u32 %s374, %s36
        %s376 = sadd.s32 %s375, %s35
        %s377 = smul.u32 2, %s376
        %s378 = ssub.s32 3, %s377
        %p379 = scmp.lt.s32.totalorder %s378, 2
        %s380 = scalar_select %p379, %s378, 2
        %s381 = smul.u32 8, %s380
        %s382 = smul.u32 %s381, 4
        %p383 = scmp.lt.s32.totalorder %s377, 2
        %s384 = scalar_select %p383, %s377, 2
        %s385 = smul.addr %s384, 4
        %s386 = smul.addr %s385, 8
        %s387 = scalar_lea.vmem %s1, %s386
        %p388 = pneg %p70
        %p389 = pneg %p67
        %p390 = pneg %p91
        %p391 = pneg %p88
        %p392 = pneg %p112
        %p393 = pneg %p109
        %p394 = pneg %p133
        %p395 = pneg %p130
        %p396 = pneg %p154
        %p397 = pneg %p151
        %p398 = pneg %p175
        %p399 = pneg %p172
        %p400 = pneg %p196
        %p401 = pneg %p193
        %p402 = pneg %p217
        %p403 = pneg %p214
        %p404 = pneg %p245
        %p405 = pneg %p242
        %s406 = sand.u32 %s232, 1
        %s407 = scalar_lea.sflag [#allocation11], %s406
        %s408 = sand.u32 %s232, 1
        %s409 = smul.addr %s408, 16
        %s410 = scalar_lea.vmem [#allocation10], %s409
        %p411 = pneg %p273
        %p412 = pneg %p270
        %s413 = sand.u32 %s31, 1
        %s414 = scalar_lea.sflag [#allocation13], %s413
        %s415 = sand.u32 %s260, 1
        %s416 = smul.addr %s415, 16
        %s417 = scalar_lea.vmem [#allocation12], %s416
        %p418 = pneg %p301
        %p419 = pneg %p298
        %s420 = sand.u32 %s31, 1
        %s421 = scalar_lea.sflag [#allocation13], %s420
        %s422 = sand.u32 %s288, 1
        %s423 = smul.addr %s422, 16
        %s424 = scalar_lea.vmem [#allocation14], %s423
        %s425 = ssub.s32 1, %s35
        %s426 = smul.u32 %s425, %s36
        %s427 = sadd.s32 %s426, %s35
        %s428 = smul.u32 2, %s427
        %s429 = ssub.s32 3, %s428
        %p430 = scmp.lt.s32.totalorder %s429, 2
        %s431 = scalar_select %p430, %s429, 2
        %s432 = smul.u32 8, %s431
        %s433 = smul.u32 %s432, 4
        %p434 = scmp.lt.s32.totalorder %s428, 2
        %s435 = scalar_select %p434, %s428, 2
        %s436 = smul.addr %s435, 4
        %s437 = smul.addr %s436, 8
        %s438 = scalar_lea.vmem %s1, %s437
        %s439 = ssub.s32 1, %s35
        %s440 = smul.u32 %s439, %s36
        %s441 = sadd.s32 %s440, %s35
        %s442 = smul.u32 2, %s441
        %s443 = ssub.s32 3, %s442
        %p444 = scmp.lt.s32.totalorder %s443, 2
        %s445 = scalar_select %p444, %s443, 2
        %s446 = smul.u32 8, %s445
        %s447 = smul.u32 %s446, 4
        %s448 = smul.u32 %s35, %s36
        %s449 = smul.u32 2, %s448
        %s450 = ssub.s32 3, %s449
        %p451 = scmp.lt.s32.totalorder %s450, 2
        %s452 = scalar_select %p451, %s450, 2
        %s453 = smul.u32 8, %s452
        %s454 = smul.u32 %s35, %s36
        %s455 = smul.u32 2, %s454
        %s456 = ssub.s32 3, %s455
        %p457 = scmp.lt.s32.totalorder %s456, 2
        %s458 = scalar_select %p457, %s456, 2
        %s459 = smul.u32 8, %s458
        %s460 = smul.u32 %s35, %s36
        %s461 = smul.u32 2, %s460
        %s462 = ssub.s32 3, %s461
        %p463 = scmp.lt.s32.totalorder %s462, 2
        %s464 = scalar_select %p463, %s462, 2
        %s465 = smul.u32 8, %s464
        %p466 = scmp.eq.s32.totalorder %s35, 0
        // Predicated region
        $region53: #{extended_yaleb_net.1} parent=51 // pred_check
          %p467 = pneg %p466
        $region54: #{extended_yaleb_net.1} parent=51 // pred_check_branch
          %469 = sbr.rel (%p467) target = $region56
        $region55: #{extended_yaleb_net.1} parent=51 // pred_region
          %p470 = scmp.eq.s32.totalorder %s36, 0
          // Predicated region
          $region57: #{extended_yaleb_net.1} parent=55 // pred_check
            %p471 = pneg %p470
          $region58: #{extended_yaleb_net.1} parent=55 // pred_check_branch
            %473 = sbr.rel (%p471) target = $region60
          $region59: #{extended_yaleb_net.1} parent=55 // pred_region
            %474 = vst [vmem:[#allocation3] sm:$0x1] 0.0
            %475 = vst [vmem:[#allocation4] sm:$0x1] 0.0
          $region60: #{extended_yaleb_net.1} parent=55 // pred_fallthru
            _
          %v476 = vld [vmem:[%s438] sm:$0xff]
          %v477 = vld [vmem:[%s438 + $0x8] sm:$0xff]
          %v478 = vld [vmem:[%s438 + $0x10] sm:$0xff]
          %v479 = vld [vmem:[%s438 + $0x18] sm:$0xff]
          %v480 = vld [vmem:[%s438 + $0x20] sm:$0xff]
          %v481 = vld [vmem:[%s438 + $0x28] sm:$0xff]
          %v482 = vld [vmem:[%s438 + $0x30] sm:$0xff]
          %v483 = vld [vmem:[%s438 + $0x38] sm:$0xff]
          %v484 = vld [vmem:[%s2] sm:$0xff]
          %v485 = vld [vmem:[%s2 + $0x8] sm:$0xff]
          %v486 = vld [vmem:[%s2 + $0x10] sm:$0xff]
          %v487 = vld [vmem:[%s2 + $0x18] sm:$0xff]
          %v488 = vld [vmem:[%s2 + $0x20] sm:$0xff]
          %v489 = vld [vmem:[%s2 + $0x28] sm:$0xff]
          %v490 = vld [vmem:[%s2 + $0x30] sm:$0xff]
          %v491 = vld [vmem:[%s2 + $0x38] sm:$0xff]
          %v492 = vld [vmem:[%s2 + $0x40] sm:$0xff]
          %v493 = vld [vmem:[%s2 + $0x48] sm:$0xff]
          %v494 = vld [vmem:[%s2 + $0x50] sm:$0xff]
          %v495 = vld [vmem:[%s2 + $0x58] sm:$0xff]
          %v496 = vld [vmem:[%s2 + $0x60] sm:$0xff]
          %v497 = vld [vmem:[%s2 + $0x68] sm:$0xff]
          %v498 = vld [vmem:[%s2 + $0x70] sm:$0xff]
          %v499 = vld [vmem:[%s2 + $0x78] sm:$0xff]
          %v500 = vld [vmem:[%s2 + $0x80] sm:$0xff]
          %v501 = vld [vmem:[%s2 + $0x88] sm:$0xff]
          %v502 = vld [vmem:[%s2 + $0x90] sm:$0xff]
          %v503 = vld [vmem:[%s2 + $0x98] sm:$0xff]
          %v504 = vld [vmem:[%s2 + $0xa0] sm:$0xff]
          %v505 = vld [vmem:[%s2 + $0xa8] sm:$0xff]
          %v506 = vld [vmem:[%s2 + $0xb0] sm:$0xff]
          %v507 = vld [vmem:[%s2 + $0xb8] sm:$0xff]
          %v508 = vld [vmem:[%s2 + $0xc0] sm:$0xff]
          %v509 = vld [vmem:[%s2 + $0xc8] sm:$0xff]
          %v510 = vld [vmem:[%s2 + $0xd0] sm:$0xff]
          %v511 = vld [vmem:[%s2 + $0xd8] sm:$0xff]
          %v512 = vld [vmem:[%s2 + $0xe0] sm:$0xff]
          %v513 = vld [vmem:[%s2 + $0xe8] sm:$0xff]
          %v514 = vld [vmem:[%s2 + $0xf0] sm:$0xff]
          %v515 = vld [vmem:[%s2 + $0xf8] sm:$0xff]
          %v516 = vld [vmem:[%s2 + $0x100] sm:$0xff]
          %v517 = vld [vmem:[%s2 + $0x108] sm:$0xff]
          %v518 = vld [vmem:[%s2 + $0x110] sm:$0xff]
          %v519 = vld [vmem:[%s2 + $0x118] sm:$0xff]
          %v520 = vld [vmem:[%s2 + $0x120] sm:$0xff]
          %v521 = vld [vmem:[%s2 + $0x128] sm:$0xff]
          %v522 = vld [vmem:[%s2 + $0x130] sm:$0xff]
          %v523 = vld [vmem:[%s2 + $0x138] sm:$0xff]
          %v524 = vld [vmem:[%s2 + $0x140] sm:$0xff]
          %v525 = vld [vmem:[%s2 + $0x148] sm:$0xff]
          %v526 = vld [vmem:[%s2 + $0x150] sm:$0xff]
          %v527 = vld [vmem:[%s2 + $0x158] sm:$0xff]
          %v528 = vld [vmem:[%s2 + $0x160] sm:$0xff]
          %v529 = vld [vmem:[%s2 + $0x168] sm:$0xff]
          %v530 = vld [vmem:[%s2 + $0x170] sm:$0xff]
          %v531 = vld [vmem:[%s2 + $0x178] sm:$0xff]
          %v532 = vld [vmem:[%s2 + $0x180] sm:$0xff]
          %v533 = vld [vmem:[%s2 + $0x188] sm:$0xff]
          %v534 = vld [vmem:[%s2 + $0x190] sm:$0xff]
          %v535 = vld [vmem:[%s2 + $0x198] sm:$0xff]
          %v536 = vld [vmem:[%s2 + $0x1a0] sm:$0xff]
          %v537 = vld [vmem:[%s2 + $0x1a8] sm:$0xff]
          %v538 = vld [vmem:[%s2 + $0x1b0] sm:$0xff]
          %v539 = vld [vmem:[%s2 + $0x1b8] sm:$0xff]
          %v540 = vld [vmem:[%s2 + $0x1c0] sm:$0xff]
          %v541 = vld [vmem:[%s2 + $0x1c8] sm:$0xff]
          %v542 = vld [vmem:[%s2 + $0x1d0] sm:$0xff]
          %v543 = vld [vmem:[%s2 + $0x1d8] sm:$0xff]
          %v544 = vld [vmem:[%s2 + $0x1e0] sm:$0xff]
          %v545 = vld [vmem:[%s2 + $0x1e8] sm:$0xff]
          %v546 = vld [vmem:[%s2 + $0x1f0] sm:$0xff]
          %v547 = vld [vmem:[%s3] sm:$0x1]
          %v549 = vperm.slane %v547, 0
          %vm551 = vcmask 982016
          %v553 = vsel %vm551, %v479, 0
          %v556 = vsel %vm551, %v483, 0
          %558 = vmatpush.msra.mxu0 %v499
          %559 = vmatpush.msra.mxu0 %v498
          %560 = vmatpush.msra.mxu0 %v497
          %561 = vmatpush.msra.mxu0 %v496
          %562 = vmatpush.msra.mxu0 %v495
          %563 = vmatpush.msra.mxu0 %v494
          %564 = vmatpush.msra.mxu0 %v493
          %565 = vmatpush.msra.mxu0 %v492
          %566 = vmatpush.msra.mxu0 %v491
          %567 = vmatpush.msra.mxu0 %v490
          %568 = vmatpush.msra.mxu0 %v489
          %569 = vmatpush.msra.mxu0 %v488
          %570 = vmatpush.msra.mxu0 %v487
          %571 = vmatpush.msra.mxu0 %v486
          %572 = vmatpush.msra.mxu0 %v485
          %573 = vmatpush.msra.mxu0 %v484
          %574 = vmatmul.f32.gmra.mxu0 %v476
          %v575 = vpop.f32.mrf.mxu0
          %v576 = vadd.f32 %v549, %v575
          %577 = vmatmul.f32.gmra.mxu0 %v480
          %v578 = vpop.f32.mrf.mxu0
          %v579 = vadd.f32 %v549, %v578
          %580 = vdwg.mxu0
          %581 = vmatpush.msra.mxu0 %v515
          %582 = vmatpush.msra.mxu0 %v514
          %583 = vmatpush.msra.mxu0 %v513
          %584 = vmatpush.msra.mxu0 %v512
          %585 = vmatpush.msra.mxu0 %v511
          %586 = vmatpush.msra.mxu0 %v510
          %587 = vmatpush.msra.mxu0 %v509
          %588 = vmatpush.msra.mxu0 %v508
          %589 = vmatpush.msra.mxu0 %v507
          %590 = vmatpush.msra.mxu0 %v506
          %591 = vmatpush.msra.mxu0 %v505
          %592 = vmatpush.msra.mxu0 %v504
          %593 = vmatpush.msra.mxu0 %v503
          %594 = vmatpush.msra.mxu0 %v502
          %595 = vmatpush.msra.mxu0 %v501
          %596 = vmatpush.msra.mxu0 %v500
          %597 = vmatmul.f32.gmra.mxu0 %v477
          %v598 = vpop.f32.mrf.mxu0
          %v599 = vadd.f32 %v576, %v598
          %600 = vmatmul.f32.gmra.mxu0 %v481
          %v601 = vpop.f32.mrf.mxu0
          %v602 = vadd.f32 %v579, %v601
          %603 = vdwg.mxu0
          %604 = vmatpush.msra.mxu0 %v531
          %605 = vmatpush.msra.mxu0 %v530
          %606 = vmatpush.msra.mxu0 %v529
          %607 = vmatpush.msra.mxu0 %v528
          %608 = vmatpush.msra.mxu0 %v527
          %609 = vmatpush.msra.mxu0 %v526
          %610 = vmatpush.msra.mxu0 %v525
          %611 = vmatpush.msra.mxu0 %v524
          %612 = vmatpush.msra.mxu0 %v523
          %613 = vmatpush.msra.mxu0 %v522
          %614 = vmatpush.msra.mxu0 %v521
          %615 = vmatpush.msra.mxu0 %v520
          %616 = vmatpush.msra.mxu0 %v519
          %617 = vmatpush.msra.mxu0 %v518
          %618 = vmatpush.msra.mxu0 %v517
          %619 = vmatpush.msra.mxu0 %v516
          %620 = vmatmul.f32.gmra.mxu0 %v478
          %v621 = vpop.f32.mrf.mxu0
          %v622 = vadd.f32 %v599, %v621
          %623 = vmatmul.f32.gmra.mxu0 %v482
          %v624 = vpop.f32.mrf.mxu0
          %v625 = vadd.f32 %v602, %v624
          %626 = vdwg.mxu0
          %627 = vmatpush.msra.mxu0 0.0
          %628 = vmatpush.msra.mxu0 %v546
          %629 = vmatpush.msra.mxu0 %v545
          %630 = vmatpush.msra.mxu0 %v544
          %631 = vmatpush.msra.mxu0 %v543
          %632 = vmatpush.msra.mxu0 %v542
          %633 = vmatpush.msra.mxu0 %v541
          %634 = vmatpush.msra.mxu0 %v540
          %635 = vmatpush.msra.mxu0 %v539
          %636 = vmatpush.msra.mxu0 %v538
          %637 = vmatpush.msra.mxu0 %v537
          %638 = vmatpush.msra.mxu0 %v536
          %639 = vmatpush.msra.mxu0 %v535
          %640 = vmatpush.msra.mxu0 %v534
          %641 = vmatpush.msra.mxu0 %v533
          %642 = vmatpush.msra.mxu0 %v532
          %643 = vmatmul.f32.gmra.mxu0 %v553
          %v644 = vpop.f32.mrf.mxu0
          %v645 = vadd.f32 %v622, %v644
          %646 = vmatmul.f32.gmra.mxu0 %v556
          %v647 = vpop.f32.mrf.mxu0
          %v648 = vadd.f32 %v625, %v647
          %649 = vdwg.mxu0
          %s650 = smul.u32 %s36, 16
          %s651 = scalar_lea.vmem [#allocation2], %s650
          %652 = vst [vmem:[%s651] sm:$0xff] %v645
          %653 = vst [vmem:[%s651 + $0x8] sm:$0xff] %v648
          %s654 = sadd.s32 %s36, 1
          %s655 = smul.u32 %s654, 16
          %s656 = sld [smem:[#allocation8]]
          %p657 = scmp.gt.s32.totalorder %s655, %s656
          // Predicated region
          $region61: #{extended_yaleb_net.1} parent=55 // pred_check
            %p658 = pneg %p657
          $region62: #{extended_yaleb_net.1} parent=55 // pred_check_branch
            %660 = sbr.rel (%p658) target = $region64
          $region63: #{extended_yaleb_net.1} parent=55 // pred_region
            %v661 = vlaneseq
            %v662 = vshrl.u32 %v661, 7
            %v663 = vadd.s32 %v662, 8
            %v664 = vstv %s650
            %v665 = vadd.s32 %v662, %v664
            %v666 = vadd.s32 %v663, %v664
            %s667 = sld [smem:[#allocation8]]
            %v668 = vstv %s667
            %vm669 = vcmp.lt.s32.totalorder %v665, %v668
            %vm670 = vcmp.lt.s32.totalorder %v666, %v668
            %v671 = vsel %vm669, %v645, 0.0
            %v672 = vsel %vm670, %v648, 0.0
            %v673 = vld [vmem:[#allocation3] sm:$0x1]
            %v674 = vadd.f32 %v671, %v672
            %v675 = vrot.slane %v674, 4
            %v676 = vadd.f32 %v674, %v675
            %v677 = vrot.slane %v676, 2
            %v678 = vadd.f32 %v676, %v677
            %v679 = vrot.slane %v678, 1
            %v680 = vadd.f32 %v678, %v679
            %v681 = vadd.f32 %v673, %v680
            %682 = vst [vmem:[#allocation3] sm:$0x1] %v681
            %v683 = vld [vmem:[#allocation4] sm:$0x1]
            %v684 = vmul.f32 %v671, %v671
            %v685 = vmul.f32 %v672, %v672
            %v686 = vadd.f32 %v684, %v685
            %v687 = vrot.slane %v686, 4
            %v688 = vadd.f32 %v686, %v687
            %v689 = vrot.slane %v688, 2
            %v690 = vadd.f32 %v688, %v689
            %v691 = vrot.slane %v690, 1
            %v692 = vadd.f32 %v690, %v691
            %v693 = vadd.f32 %v683, %v692
            %694 = vst [vmem:[#allocation4] sm:$0x1] %v693
          $region64: #{extended_yaleb_net.1} parent=55 // pred_fallthru
            _
          %p695 = scmp.le.s32.totalorder %s655, %s656
          // Predicated region
          $region65: #{extended_yaleb_net.1} parent=55 // pred_check
            %p696 = pneg %p695
          $region66: #{extended_yaleb_net.1} parent=55 // pred_check_branch
            %698 = sbr.rel (%p696) target = $region68
          $region67: #{extended_yaleb_net.1} parent=55 // pred_region
            %v699 = vld [vmem:[#allocation3] sm:$0x1]
            %v700 = vadd.f32 %v645, %v648
            %v701 = vrot.slane %v700, 4
            %v702 = vadd.f32 %v700, %v701
            %v703 = vrot.slane %v702, 2
            %v704 = vadd.f32 %v702, %v703
            %v705 = vrot.slane %v704, 1
            %v706 = vadd.f32 %v704, %v705
            %v707 = vadd.f32 %v699, %v706
            %708 = vst [vmem:[#allocation3] sm:$0x1] %v707
            %v709 = vld [vmem:[#allocation4] sm:$0x1]
            %v710 = vmul.f32 %v645, %v645
            %v711 = vmul.f32 %v648, %v648
            %v712 = vadd.f32 %v710, %v711
            %v713 = vrot.slane %v712, 4
            %v714 = vadd.f32 %v712, %v713
            %v715 = vrot.slane %v714, 2
            %v716 = vadd.f32 %v714, %v715
            %v717 = vrot.slane %v716, 1
            %v718 = vadd.f32 %v716, %v717
            %v719 = vadd.f32 %v709, %v718
            %720 = vst [vmem:[#allocation4] sm:$0x1] %v719
          $region68: #{extended_yaleb_net.1} parent=55 // pred_fallthru
            _
          %p721 = scmp.eq.s32.totalorder %s36, 1
          // Predicated region
          $region69: #{extended_yaleb_net.1} parent=55 // pred_check
            %p722 = pneg %p721
          $region70: #{extended_yaleb_net.1} parent=55 // pred_check_branch
            %724 = sbr.rel (%p722) target = $region72
          $region71: #{extended_yaleb_net.1} parent=55 // pred_region
            %s725 = sld [smem:[#allocation8]]
            %s726 = scvt.s32.f32 %s725
            %v727 = vstv %s726
            %v728 = vrcp.pop %v727
            %v729 = vmul.f32 %v727, %v728
            %v730 = vsub.f32 1.0, %v729
            %v731 = vmul.f32 %v728, %v730
            %v732 = vadd.f32 %v728, %v731
            %vm733 = vweird.f32 %v727
            %vm734 = vweird.f32 %v728
            %vm735 = vmor %vm733, %vm734
            %v736 = vsel %vm735, %v728, %v732
            %v737 = vand.u32 2147483647, %v727
            %vm738 = vcmp.eq.f32.partialorder %v737, 8.507059e+37
            %v739 = vand.u32 %v727, 2147483648
            %v740 = vor.u32 1.1754944e-38, %v739
            %v741 = vsel %vm738, %v740, %v736
            %s742 = vtos %v741
            %v743 = vld [vmem:[#allocation3] sm:$0x1]
            %v744 = vstv %s742
            %v745 = vmul.f32 %v743, %v744
            %v746 = vld [vmem:[#allocation4] sm:$0x1]
            %v747 = vmul.f32 %v746, %v744
            %v748 = vmul.f32 %v745, %v745
            %v749 = vsub.f32 %v747, %v748
            %v750 = vmax.f32 %v749, 0.0
            %v751 = vld [vmem:[%s4] sm:$0x1]
            %v752 = vadd.f32 %v750, 1e-05
            %v753 = vrsqrt.pop %v752
            %v754 = vmul.f32 %v753, %v752
            %v755 = vmul.f32 %v754, %v753
            %v756 = vmul.f32 0.5, %v755
            %v757 = vsub.f32 1.5, %v756
            %v758 = vmul.f32 %v753, %v757
            %vm759 = vweird.f32 %v752
            %vm760 = vweird.f32 %v753
            %vm761 = vmor %vm759, %vm760
            %v762 = vsel %vm761, %v753, %v758
            %v763 = vmul.f32 %v751, %v762
            %764 = vst [vmem:[#allocation5] sm:$0x1] %v763
            %v765 = vld [vmem:[%s5] sm:$0x1]
            %v766 = vmul.f32 %v745, %v763
            %v767 = vsub.f32 %v765, %v766
            %768 = vst [vmem:[#allocation6] sm:$0x1] %v767
          $region72: #{extended_yaleb_net.1} parent=55 // pred_fallthru
            _
        $region56: #{extended_yaleb_net.1} parent=51 // pred_fallthru
          _
        %p769 = scmp.eq.s32.totalorder %s35, 1
        // Predicated region
        $region73: #{extended_yaleb_net.1} parent=51 // pred_check
          %p770 = pneg %p769
        $region74: #{extended_yaleb_net.1} parent=51 // pred_check_branch
          %772 = sbr.rel (%p770) target = $region76
        $region75: #{extended_yaleb_net.1} parent=51 // pred_region
          %s773 = smul.u32 %s36, 16
          %s774 = scalar_lea.vmem [#allocation2], %s773
          %v775 = vld [vmem:[%s774] sm:$0xff]
          %v776 = vld [vmem:[%s774 + $0x8] sm:$0xff]
          %v777 = vld [vmem:[#allocation5] sm:$0x1]
          %v778 = vld [vmem:[#allocation6] sm:$0x1]
          %s779 = sld [smem:[#allocation9]]
          %v780 = vld [vmem:[%s7] sm:$0xff]
          %v781 = vld [vmem:[%s7 + $0x8] sm:$0xff]
          %v782 = vld [vmem:[%s7 + $0x10] sm:$0xff]
          %v783 = vld [vmem:[%s7 + $0x18] sm:$0xff]
          %v784 = vld [vmem:[%s7 + $0x20] sm:$0xff]
          %v785 = vld [vmem:[%s7 + $0x28] sm:$0xff]
          %v786 = vld [vmem:[%s7 + $0x30] sm:$0xff]
          %v787 = vld [vmem:[%s7 + $0x38] sm:$0xff]
          %v788 = vld [vmem:[%s7 + $0x40] sm:$0xff]
          %v789 = vld [vmem:[%s7 + $0x48] sm:$0xff]
          %v790 = vld [vmem:[%s7 + $0x50] sm:$0xff]
          %v791 = vld [vmem:[%s7 + $0x58] sm:$0xff]
          %v792 = vld [vmem:[%s7 + $0x60] sm:$0xff]
          %v793 = vld [vmem:[%s7 + $0x68] sm:$0xff]
          %v794 = vld [vmem:[%s7 + $0x70] sm:$0xff]
          %v795 = vld [vmem:[%s7 + $0x78] sm:$0xff]
          %v796 = vld [vmem:[%s8] sm:$0x1]
          %v798 = vperm.slane %v777, 0
          %v800 = vmul.f32 %v775, %v798
          %v801 = vmul.f32 %v776, %v798
          %v803 = vperm.slane %v778, 0
          %v805 = vadd.f32 %v800, %v803
          %v806 = vadd.f32 %v801, %v803
          %vm807 = vcmp.ge.f32.partialorder %v805, 0.0
          %vm808 = vcmp.ge.f32.partialorder %v806, 0.0
          %v809 = vstv %s779
          %v810 = vmul.f32 %v809, %v805
          %v811 = vmul.f32 %v809, %v806
          %v812 = vsel %vm807, %v805, %v810
          %v813 = vsel %vm808, %v806, %v811
          %v815 = vperm.slane %v796, 0
          %817 = vmatpush.msra.mxu0 %v795
          %818 = vmatpush.msra.mxu0 %v794
          %819 = vmatpush.msra.mxu0 %v793
          %820 = vmatpush.msra.mxu0 %v792
          %821 = vmatpush.msra.mxu0 %v791
          %822 = vmatpush.msra.mxu0 %v790
          %823 = vmatpush.msra.mxu0 %v789
          %824 = vmatpush.msra.mxu0 %v788
          %825 = vmatpush.msra.mxu0 %v787
          %826 = vmatpush.msra.mxu0 %v786
          %827 = vmatpush.msra.mxu0 %v785
          %828 = vmatpush.msra.mxu0 %v784
          %829 = vmatpush.msra.mxu0 %v783
          %830 = vmatpush.msra.mxu0 %v782
          %831 = vmatpush.msra.mxu0 %v781
          %832 = vmatpush.msra.mxu0 %v780
          %833 = vmatmul.f32.gmra.mxu0 %v812
          %v834 = vpop.f32.mrf.mxu0
          %v835 = vadd.f32 %v815, %v834
          %836 = vmatmul.f32.gmra.mxu0 %v813
          %v837 = vpop.f32.mrf.mxu0
          %v838 = vadd.f32 %v815, %v837
          %839 = vdwg.mxu0
          %840 = vmax.xlane.f32.xlu0 %v835
          %v841 = vpop.xlane.xlu0 %840
          %842 = vmax.xlane.f32.xlu0 %v838
          %v843 = vpop.xlane.xlu0 %842
          %v844 = vsub.f32 %v835, %v841
          %v845 = vsub.f32 %v838, %v843
          %v846 = vmul.f32 %v844, 1.442695
          %v847 = vpow.pop %v846
          %v848 = vmul.f32 %v845, 1.442695
          %v849 = vpow.pop %v848
          %850 = vadd.xlane.f32.xlu0 %v847
          %v851 = vpop.xlane.xlu0 %850
          %852 = vadd.xlane.f32.xlu0 %v849
          %v853 = vpop.xlane.xlu0 %852
          %v854 = vrcp.pop %v851
          %v855 = vmul.f32 %v851, %v854
          %v856 = vsub.f32 1.0, %v855
          %v857 = vmul.f32 %v854, %v856
          %v858 = vadd.f32 %v854, %v857
          %vm859 = vweird.f32 %v851
          %vm860 = vweird.f32 %v854
          %vm861 = vmor %vm859, %vm860
          %v862 = vsel %vm861, %v854, %v858
          %v863 = vand.u32 2147483647, %v851
          %vm864 = vcmp.eq.f32.partialorder %v863, 8.507059e+37
          %v865 = vand.u32 %v851, 2147483648
          %v866 = vor.u32 1.1754944e-38, %v865
          %v867 = vsel %vm864, %v866, %v862
          %v868 = vrcp.pop %v853
          %v869 = vmul.f32 %v853, %v868
          %v870 = vsub.f32 1.0, %v869
          %v871 = vmul.f32 %v868, %v870
          %v872 = vadd.f32 %v868, %v871
          %vm873 = vweird.f32 %v853
          %vm874 = vweird.f32 %v868
          %vm875 = vmor %vm873, %vm874
          %v876 = vsel %vm875, %v868, %v872
          %v877 = vand.u32 2147483647, %v853
          %vm878 = vcmp.eq.f32.partialorder %v877, 8.507059e+37
          %v879 = vand.u32 %v853, 2147483648
          %v880 = vor.u32 1.1754944e-38, %v879
          %v881 = vsel %vm878, %v880, %v876
          %v882 = vmul.f32 %v847, %v867
          %v883 = vmul.f32 %v849, %v881
          %v884 = vlog2.pop %v851
          %v885 = vmul.f32 %v884, 0.6931472
          %v886 = vlog2.pop %v853
          %v887 = vmul.f32 %v886, 0.6931472
          %v888 = vsub.f32 %v844, %v885
          %v889 = vsub.f32 %v845, %v887
          %vm890 = vcmask 310272
          %891 = vst.msk [vmem:[%s410] sm:$0xff] %vm890, %v888
          %892 = vst.msk [vmem:[%s410 + $0x8] sm:$0xff] %vm890, %v889
          %vm893 = vcmask 818176
          %894 = vst.msk [vmem:[%s417] sm:$0xff] %vm893, %v812
          %895 = vst.msk [vmem:[%s417 + $0x8] sm:$0xff] %vm893, %v813
          %896 = vst.msk [vmem:[%s424] sm:$0xff] %vm890, %v882
          %897 = vst.msk [vmem:[%s424 + $0x8] sm:$0xff] %vm890, %v883
        $region76: #{extended_yaleb_net.1} parent=51 // pred_fallthru
          _
        %s898 = sand.u32 %s232, 1
        %s899 = scalar_lea.sflag [#allocation11], %s898
        %s900 = sand.u32 %s232, 1
        %s901 = smul.addr %s900, 16
        %s902 = scalar_lea.vmem [#allocation10], %s901
        %s903 = sand.u32 %s31, 1
        %s904 = scalar_lea.sflag [#allocation13], %s903
        %s905 = sand.u32 %s260, 1
        %s906 = smul.addr %s905, 16
        %s907 = scalar_lea.vmem [#allocation12], %s906
        %s908 = sand.u32 %s31, 1
        %s909 = scalar_lea.sflag [#allocation13], %s908
        %s910 = sand.u32 %s288, 1
        %s911 = smul.addr %s910, 16
        %s912 = scalar_lea.vmem [#allocation14], %s911
        // Predicated region
        $region77: #{extended_yaleb_net.1} parent=51 // pred_check
          %p913 = pneg %p242
        $region78: #{extended_yaleb_net.1} parent=51 // pred_check_branch
          %915 = sbr.rel (%p913) target = $region80
        $region79: #{extended_yaleb_net.1} parent=51 // pred_region
          %s916 = smul.u32 %s35, %s36
          %s917 = smul.u32 2, %s916
          %s918 = ssub.s32 3, %s917
          %p919 = scmp.lt.s32.totalorder %s918, 2
          %s920 = scalar_select %p919, %s918, 2
          %s921 = smul.u32 8, %s920
          %s922 = ssub.s32 16, %s921
          %s923 = sshll.u32 %s922, 4
          %924 = vsyncadd %s899, %s923
          %p925 = scmp.ne.s32.totalorder 0, %s921
          %s926 = smul.addr %s917, 8
          %s927 = scalar_lea.hbm %s9, %s926
          %s928 = smul.u32 8, %s920
          %s929 = sshll.u32 %s902, 4
          %s930 = int_to_ptr.vmem [resolvable:$true] %s929
          %s931 = sshll.u32 %s927, 4
          %s932 = int_to_ptr.hbm [resolvable:$true] %s931
          %s933 = sshll.u32 %s928, 4
          %937 = dma.vmem_to_hbm [thread:$0]  (%p925), %s930, %s933, %s932, %s899, 128, 128, 8
        $region80: #{extended_yaleb_net.1} parent=51 // pred_fallthru
          _
        // Predicated region
        $region81: #{extended_yaleb_net.1} parent=51 // pred_check
          %p938 = pneg %p270
        $region82: #{extended_yaleb_net.1} parent=51 // pred_check_branch
          %940 = sbr.rel (%p938) target = $region84
        $region83: #{extended_yaleb_net.1} parent=51 // pred_region
          %s941 = smul.u32 %s35, %s36
          %s942 = smul.u32 2, %s941
          %s943 = ssub.s32 3, %s942
          %p944 = scmp.lt.s32.totalorder %s943, 2
          %s945 = scalar_select %p944, %s943, 2
          %s946 = smul.u32 8, %s945
          %s947 = ssub.s32 16, %s946
          %s948 = sshll.u32 %s947, 4
          %949 = vsyncadd %s904, %s948
          %p950 = scmp.ne.s32.totalorder 0, %s946
          %s951 = smul.addr %s942, 8
          %s952 = scalar_lea.hbm %s10, %s951
          %s953 = smul.u32 8, %s945
          %s954 = sshll.u32 %s907, 4
          %s955 = int_to_ptr.vmem [resolvable:$true] %s954
          %s956 = sshll.u32 %s952, 4
          %s957 = int_to_ptr.hbm [resolvable:$true] %s956
          %s958 = sshll.u32 %s953, 4
          %962 = dma.vmem_to_hbm [thread:$0]  (%p950), %s955, %s958, %s957, %s904, 128, 128, 8
        $region84: #{extended_yaleb_net.1} parent=51 // pred_fallthru
          _
        // Predicated region
        $region85: #{extended_yaleb_net.1} parent=51 // pred_check
          %p963 = pneg %p298
        $region86: #{extended_yaleb_net.1} parent=51 // pred_check_branch
          %965 = sbr.rel (%p963) target = $region88
        $region87: #{extended_yaleb_net.1} parent=51 // pred_region
          %s966 = smul.u32 %s35, %s36
          %s967 = smul.u32 2, %s966
          %s968 = ssub.s32 3, %s967
          %p969 = scmp.lt.s32.totalorder %s968, 2
          %s970 = scalar_select %p969, %s968, 2
          %s971 = smul.u32 8, %s970
          %s972 = ssub.s32 16, %s971
          %s973 = sshll.u32 %s972, 4
          %974 = vsyncadd %s909, %s973
          %p975 = scmp.ne.s32.totalorder 0, %s971
          %s976 = smul.addr %s967, 8
          %s977 = scalar_lea.hbm %s11, %s976
          %s978 = smul.u32 8, %s970
          %s979 = sshll.u32 %s912, 4
          %s980 = int_to_ptr.vmem [resolvable:$true] %s979
          %s981 = sshll.u32 %s977, 4
          %s982 = int_to_ptr.hbm [resolvable:$true] %s981
          %s983 = sshll.u32 %s978, 4
          %987 = dma.vmem_to_hbm [thread:$0]  (%p975), %s980, %s983, %s982, %s909, 128, 128, 8
        $region88: #{extended_yaleb_net.1} parent=51 // pred_fallthru
          _
      $region52: #{extended_yaleb_net.1} parent=5 // pred_fallthru
        _
      %p988 = scmp.le.s32.totalorder 2, %s26
      // Predicated region
      $region89: #{extended_yaleb_net.1} parent=5 // pred_check
        %p989 = pneg %p988
      $region90: #{extended_yaleb_net.1} parent=5 // pred_check_branch
        %991 = sbr.rel (%p989) target = $region92
      $region91: #{extended_yaleb_net.1} parent=5 // pred_region
        %s992 = ssub.s32 %s26, 2
        // Predicated region
        $region93: #{extended_yaleb_net.1} parent=91 // pred_check
          %p993 = pneg %p248
        $region94: #{extended_yaleb_net.1} parent=91 // pred_check_branch
          %995 = sbr.rel (%p993) target = $region96
        $region95: #{extended_yaleb_net.1} parent=91 // pred_region
          %s996 = sand.u32 %s233, 1
          %s997 = scalar_lea.sflag [#allocation11], %s996
          %s998 = sand.u32 %s233, 1
          %s999 = smul.addr %s998, 16
          %s1000 = scalar_lea.vmem [#allocation10], %s999
          %1002 = dma.done %s997, 256
        $region96: #{extended_yaleb_net.1} parent=91 // pred_fallthru
          _
        // Predicated region
        $region97: #{extended_yaleb_net.1} parent=91 // pred_check
          %p1003 = pneg %p276
        $region98: #{extended_yaleb_net.1} parent=91 // pred_check_branch
          %1005 = sbr.rel (%p1003) target = $region100
        $region99: #{extended_yaleb_net.1} parent=91 // pred_region
          %s1006 = sand.u32 %s32, 1
          %s1007 = scalar_lea.sflag [#allocation13], %s1006
          %s1008 = sand.u32 %s261, 1
          %s1009 = smul.addr %s1008, 16
          %s1010 = scalar_lea.vmem [#allocation12], %s1009
          %1012 = dma.done %s1007, 256
        $region100: #{extended_yaleb_net.1} parent=91 // pred_fallthru
          _
        // Predicated region
        $region101: #{extended_yaleb_net.1} parent=91 // pred_check
          %p1013 = pneg %p304
        $region102: #{extended_yaleb_net.1} parent=91 // pred_check_branch
          %1015 = sbr.rel (%p1013) target = $region104
        $region103: #{extended_yaleb_net.1} parent=91 // pred_region
          %s1016 = sand.u32 %s32, 1
          %s1017 = scalar_lea.sflag [#allocation13], %s1016
          %s1018 = sand.u32 %s289, 1
          %s1019 = smul.addr %s1018, 16
          %s1020 = scalar_lea.vmem [#allocation14], %s1019
          %1022 = dma.done %s1017, 256
        $region104: #{extended_yaleb_net.1} parent=91 // pred_fallthru
          _
      $region92: #{extended_yaleb_net.1} parent=5 // pred_fallthru
        _
    $region6: #{extended_yaleb_net.1} parent=1 // loop_footer
      %s30 = sadd.s32 1, %s26
    $region7: #{extended_yaleb_net.1} parent=1 // loop_footer_branch
      %25 = sbr.rel target = $region3
    $region8: #{extended_yaleb_net.1} parent=1 // loop_exit
      _
    %1023 = vsyncpa [#allocation11], 1
    %s1024 = scalar_lea.sflag [#allocation11], 1
    %1025 = vsyncpa %s1024, 1
    %1026 = vsyncpa [#allocation13], 1
    %s1027 = scalar_lea.sflag [#allocation13], 1
    %1028 = vsyncpa %s1027, 1

</llo_original>
